<compile_context>
chip_gen: v7x
topology: tpu7x:2x2x1
jax: 0.10.0
libtpu: 0.0.40
codegen_flags: <defaults>
</compile_context>

<pallas_src>
import jax
import jax.numpy as jnp
from jax.experimental import pallas as pl
from jax.experimental.pallas import tpu as pltpu

HIDDEN = 32          # hard-coded in LSTMDIS.__init__ (hidden_size = 32)
GATES = 4 * HIDDEN   # 128 lanes -> exactly one vreg lane-width
FC1_OUT = 8
FC2_OUT = 2
ELU_ALPHA = 0.2


def lstmdis_kernel(x_ref,                        # (S*B, I)      f32, VMEM
                   wih0_ref, whh0_ref, b0_ref,   # (I,4H) (H,4H) (1,4H)
                   w1cat_ref, b1_ref,            # (2H,4H) (1,4H)
                   wfc1_ref, bfc1_ref,           # (H,8)  (1,8)
                   wfc2_ref, bfc2_ref,           # (8,2)  (1,2)
                   out_ref,                      # (B,2)
                   xproj_ref):                   # scratch VMEM (S*B, 4H)
    SB, _ = x_ref.shape
    B = out_ref.shape[0]
    S = SB // B
    H = HIDDEN
    G = GATES

    # ---- Hoisted layer-0 input projection: one MXU call over all timesteps ----
    xp = jnp.dot(x_ref[...], wih0_ref[...],
                 preferred_element_type=jnp.float32) + b0_ref[...]
    xproj_ref[...] = xp

    # Loop-invariant operands, loaded / broadcast once (nothing re-broadcast
    # inside the unrolled loop).
    whh0 = whh0_ref[...]                                   # (H, 4H)
    w1cat = w1cat_ref[...]                                 # (2H, 4H)
    b1 = jnp.broadcast_to(b1_ref[...], (B, G))             # (B, 4H)

    def gates(g):
        # Full-width nonlinearities: 2 EUP passes per cell instead of 4.
        # sigmoid(x) = 0.5 * tanh(0.5 * x) + 0.5  (single EUP op + VALU mul/add)
        sg = 0.5 * jnp.tanh(0.5 * g) + 0.5
        tg = jnp.tanh(g)
        i = sg[:, 0 * H:1 * H]
        f = sg[:, 1 * H:2 * H]
        gg = tg[:, 2 * H:3 * H]
        o = sg[:, 3 * H:4 * H]
        return i, f, gg, o

    z = jnp.zeros((B, H), jnp.float32)
    h0 = c0 = h1 = c1 = z

    # Static full unroll: S is small and known at trace time, so every scratch
    # slice below has a concrete, 8-aligned start (pure static slices).
    for t in range(S):
        # ---- layer 0: x-projection precomputed, only the recurrent matmul ----
        g0 = (xproj_ref[t * B:(t + 1) * B, :]
              + jnp.dot(h0, whh0, preferred_element_type=jnp.float32))
        i0, f0, gg0, o0 = gates(g0)
        c0 = f0 * c0 + i0 * gg0
        h0 = o0 * jnp.tanh(c0)
        # ---- layer 1: fused K-concat matmul (K = 2H = 64, one MXU pass) ----
        g1 = jnp.dot(jnp.concatenate([h0, h1], axis=-1), w1cat,
                     preferred_element_type=jnp.float32) + b1
        i1, f1, gg1, o1 = gates(g1)
        c1 = f1 * c1 + i1 * gg1
        h1 = o1 * jnp.tanh(c1)

    # ---- head: fc1 -> ELU(alpha=0.2) -> fc2 ----
    y = jnp.dot(h1, wfc1_ref[...], preferred_element_type=jnp.float32) + bfc1_ref[...]
    y = jnp.where(y > 0, y, ELU_ALPHA * (jnp.exp(y) - 1.0))
    out_ref[...] = (jnp.dot(y, wfc2_ref[...], preferred_element_type=jnp.float32)
                    + bfc2_ref[...])


def init_params(key, input_size, hidden=HIDDEN):
    """Deterministic synthetic parameters mirroring the PyTorch shapes/inits."""
    ks = jax.random.split(key, 12)
    k = 1.0 / jnp.sqrt(jnp.float32(hidden))

    def u(kk, shape, bound):
        return jax.random.uniform(kk, shape, jnp.float32, -bound, bound)

    # nn.LSTM default init: U(-1/sqrt(H), 1/sqrt(H)), gate order i,f,g,o
    wih0 = u(ks[0], (4 * hidden, input_size), k)
    whh0 = u(ks[1], (4 * hidden, hidden), k)
    bih0 = u(ks[2], (4 * hidden,), k)
    bhh0 = u(ks[3], (4 * hidden,), k)
    wih1 = u(ks[4], (4 * hidden, hidden), k)
    whh1 = u(ks[5], (4 * hidden, hidden), k)
    bih1 = u(ks[6], (4 * hidden,), k)
    bhh1 = u(ks[7], (4 * hidden,), k)
    # fc weights: normal(0, 0.1) per nn.init.normal_; biases: default linear init
    wfc1 = 0.1 * jax.random.normal(ks[8], (FC1_OUT, hidden), jnp.float32)
    bfc1 = u(ks[9], (FC1_OUT,), 1.0 / jnp.sqrt(jnp.float32(hidden)))
    wfc2 = 0.1 * jax.random.normal(ks[10], (FC2_OUT, FC1_OUT), jnp.float32)
    bfc2 = u(ks[11], (FC2_OUT,), 1.0 / jnp.sqrt(jnp.float32(FC1_OUT)))

    return dict(
        wih0=wih0, whh0=whh0, b0=bih0 + bhh0,
        wih1=wih1, whh1=whh1, b1=bih1 + bhh1,
        wfc1=wfc1, bfc1=bfc1, wfc2=wfc2, bfc2=bfc2,
    )


def prepare_params(params):
    """One-time weight re-layout (transposes / layer-1 K-concat / bias reshape).

    Done outside the per-call path so no per-invocation transposes hit HBM.
    """
    return dict(
        wih0_t=jnp.transpose(params["wih0"]),                        # (I, 4H)
        whh0_t=jnp.transpose(params["whh0"]),                        # (H, 4H)
        b0=params["b0"].reshape(1, -1),                              # (1, 4H)
        w1cat=jnp.concatenate([jnp.transpose(params["wih1"]),        # (2H, 4H)
                               jnp.transpose(params["whh1"])], axis=0),
        b1=params["b1"].reshape(1, -1),                              # (1, 4H)
        wfc1_t=jnp.transpose(params["wfc1"]),                        # (H, 8)
        bfc1=params["bfc1"].reshape(1, -1),                          # (1, 8)
        wfc2_t=jnp.transpose(params["wfc2"]),                        # (8, 2)
        bfc2=params["bfc2"].reshape(1, -1),                          # (1, 2)
    )


@jax.jit
def lstmdis_forward(x, prep):
    """x: (batch, seq, input_size) float32 -> (batch, 2) float32."""
    B, S, I = x.shape
    # Pad batch to a multiple of 8 so vreg sublanes are full; padded rows are
    # computed (on zero inputs) and discarded — identical cost, no masked ops.
    B_pad = max(8, ((B + 7) // 8) * 8)

    x_sbi = jnp.transpose(x, (1, 0, 2)).astype(jnp.float32)          # (S, B, I)
    if B_pad != B:
        x_sbi = jnp.pad(x_sbi, ((0, 0), (0, B_pad - B), (0, 0)))
    x2d = x_sbi.reshape(S * B_pad, I)                                # (S*B, I)

    args = (
        x2d,
        prep["wih0_t"], prep["whh0_t"], prep["b0"],
        prep["w1cat"], prep["b1"],
        prep["wfc1_t"], prep["bfc1"],
        prep["wfc2_t"], prep["bfc2"],
    )

    out = pl.pallas_call(
        lstmdis_kernel,
        out_shape=jax.ShapeDtypeStruct((B_pad, FC2_OUT), jnp.float32),
        in_specs=[pl.BlockSpec(memory_space=pltpu.MemorySpace.VMEM)] * len(args),
        out_specs=pl.BlockSpec(memory_space=pltpu.MemorySpace.VMEM),
        scratch_shapes=[pltpu.VMEM((S * B_pad, GATES), jnp.float32)],
    )(*args)
    return out[:B]


def _reference_forward(x, params):
    """Pure-JAX reference of the same computation (for correctness check)."""
    B, S, I = x.shape
    H = HIDDEN

    def cell(x_t, h, c, wih, whh, b):
        g = x_t @ wih.T + h @ whh.T + b
        i = jax.nn.sigmoid(g[:, 0 * H:1 * H])
        f = jax.nn.sigmoid(g[:, 1 * H:2 * H])
        gg = jnp.tanh(g[:, 2 * H:3 * H])
        o = jax.nn.sigmoid(g[:, 3 * H:4 * H])
        c = f * c + i * gg
        h = o * jnp.tanh(c)
        return h, c

    h0 = c0 = h1 = c1 = jnp.zeros((B, H), jnp.float32)
    for t in range(S):
        x_t = x[:, t, :]
        h0, c0 = cell(x_t, h0, c0, params["wih0"], params["whh0"], params["b0"])
        h1, c1 = cell(h0, h1, c1, params["wih1"], params["whh1"], params["b1"])

    y = h1 @ params["wfc1"].T + params["bfc1"]
    y = jnp.where(y > 0, y, ELU_ALPHA * (jnp.exp(y) - 1.0))
    return y @ params["wfc2"].T + params["bfc2"]


if __name__ == "__main__":
    key = jax.random.PRNGKey(0)
    k_x, k_p = jax.random.split(key)

    batch, seq, input_size = 2, 8, 4
    x = jax.random.normal(k_x, (batch, seq, input_size), jnp.float32)
    params = init_params(k_p, input_size)
    prep = prepare_params(params)

    out = lstmdis_forward(x, prep)
    out = jax.block_until_ready(out)

    ref = _reference_forward(x, params)
    assert out.shape == (batch, FC2_OUT)
    assert jnp.allclose(out, ref, rtol=1e-4, atol=1e-4), (out, ref)

    print("KERNEL_OK")
</pallas_src>

<mosaic_0001>
module attributes {stable_mosaic.version = 11 : i64} {
  func.func @lstmdis_kernel(%arg0: memref<64x4xf32, #tpu.memory_space<vmem>>, %arg1: memref<4x128xf32, #tpu.memory_space<vmem>>, %arg2: memref<32x128xf32, #tpu.memory_space<vmem>>, %arg3: memref<1x128xf32, #tpu.memory_space<vmem>>, %arg4: memref<64x128xf32, #tpu.memory_space<vmem>>, %arg5: memref<1x128xf32, #tpu.memory_space<vmem>>, %arg6: memref<32x8xf32, #tpu.memory_space<vmem>>, %arg7: memref<1x8xf32, #tpu.memory_space<vmem>>, %arg8: memref<8x2xf32, #tpu.memory_space<vmem>>, %arg9: memref<1x2xf32, #tpu.memory_space<vmem>>, %arg10: memref<8x2xf32, #tpu.memory_space<vmem>>, %arg11: memref<64x128xf32, #tpu.memory_space<vmem>>) attributes {dimension_semantics = [], scalar_prefetch = 0 : i64, scratch_operands = 1 : i64, tpu.core_type = #tpu.core_type<tc>} {
    %c0 = arith.constant 0 : index
    %c0_0 = arith.constant 0 : index
    %0 = vector.load %arg0[%c0, %c0_0] : memref<64x4xf32, #tpu.memory_space<vmem>>, vector<64x4xf32>
    %c0_1 = arith.constant 0 : index
    %c0_2 = arith.constant 0 : index
    %1 = vector.load %arg1[%c0_1, %c0_2] : memref<4x128xf32, #tpu.memory_space<vmem>>, vector<4x128xf32>
    %cst = arith.constant dense<0.000000e+00> : vector<64x128xf32>
    %2 = tpu.matmul %0, %1, %cst {dimension_numbers = #tpu.dot_dimension_numbers<[1], [0], [0], [1], [0, 0, 1, 1], [], []>} : vector<64x4xf32>, vector<4x128xf32>, vector<64x128xf32> -> vector<64x128xf32>
    %c0_3 = arith.constant 0 : index
    %c0_4 = arith.constant 0 : index
    %3 = vector.load %arg3[%c0_3, %c0_4] : memref<1x128xf32, #tpu.memory_space<vmem>>, vector<1x128xf32>
    %4 = vector.broadcast %3 : vector<1x128xf32> to vector<64x128xf32>
    %5 = arith.addf %2, %4 : vector<64x128xf32>
    %c0_5 = arith.constant 0 : index
    %c0_6 = arith.constant 0 : index
    %6 = vector.load %arg11[%c0_5, %c0_6] : memref<64x128xf32, #tpu.memory_space<vmem>>, vector<64x128xf32>
    tpu.vector_store %arg11[%c0_5, %c0_6], %5 {strides = array<i32>} : memref<64x128xf32, #tpu.memory_space<vmem>>, vector<64x128xf32>,
    %c0_7 = arith.constant 0 : index
    %c0_8 = arith.constant 0 : index
    %7 = vector.load %arg2[%c0_7, %c0_8] : memref<32x128xf32, #tpu.memory_space<vmem>>, vector<32x128xf32>
    %c0_9 = arith.constant 0 : index
    %c0_10 = arith.constant 0 : index
    %8 = vector.load %arg4[%c0_9, %c0_10] : memref<64x128xf32, #tpu.memory_space<vmem>>, vector<64x128xf32>
    %c0_11 = arith.constant 0 : index
    %c0_12 = arith.constant 0 : index
    %9 = vector.load %arg5[%c0_11, %c0_12] : memref<1x128xf32, #tpu.memory_space<vmem>>, vector<1x128xf32>
    %10 = vector.shape_cast %9 : vector<1x128xf32> to vector<1x128xf32>
    %11 = vector.broadcast %10 : vector<1x128xf32> to vector<8x128xf32>
    %cst_13 = arith.constant 0.000000e+00 : f32
    %12 = vector.broadcast %cst_13 : f32 to vector<8x32xf32>
    %c0_14 = arith.constant 0 : index
    %c0_15 = arith.constant 0 : index
    %13 = vector.load %arg11[%c0_14, %c0_15] : memref<64x128xf32, #tpu.memory_space<vmem>>, vector<8x128xf32>
    %cst_16 = arith.constant dense<0.000000e+00> : vector<8x128xf32>
    %14 = tpu.matmul %12, %7, %cst_16 {dimension_numbers = #tpu.dot_dimension_numbers<[1], [0], [0], [1], [0, 0, 1, 1], [], []>} : vector<8x32xf32>, vector<32x128xf32>, vector<8x128xf32> -> vector<8x128xf32>
    %15 = arith.addf %13, %14 : vector<8x128xf32>
    %cst_17 = arith.constant 5.000000e-01 : f32
    %16 = vector.broadcast %cst_17 : f32 to vector<8x128xf32>
    %17 = arith.mulf %16, %15 : vector<8x128xf32>
    %18 = math.tanh %17 : vector<8x128xf32>
    %cst_18 = arith.constant 5.000000e-01 : f32
    %19 = vector.broadcast %cst_18 : f32 to vector<8x128xf32>
    %20 = arith.mulf %19, %18 : vector<8x128xf32>
    %cst_19 = arith.constant 5.000000e-01 : f32
    %21 = vector.broadcast %cst_19 : f32 to vector<8x128xf32>
    %22 = arith.addf %20, %21 : vector<8x128xf32>
    %23 = math.tanh %15 : vector<8x128xf32>
    %24 = vector.extract_strided_slice %22 {offsets = [0, 0], sizes = [8, 32], strides = [1, 1]} : vector<8x128xf32> to vector<8x32xf32>
    %25 = vector.extract_strided_slice %22 {offsets = [0, 32], sizes = [8, 32], strides = [1, 1]} : vector<8x128xf32> to vector<8x32xf32>
    %26 = vector.extract_strided_slice %23 {offsets = [0, 64], sizes = [8, 32], strides = [1, 1]} : vector<8x128xf32> to vector<8x32xf32>
    %27 = vector.extract_strided_slice %22 {offsets = [0, 96], sizes = [8, 32], strides = [1, 1]} : vector<8x128xf32> to vector<8x32xf32>
    %28 = arith.mulf %25, %12 : vector<8x32xf32>
    %29 = arith.mulf %24, %26 : vector<8x32xf32>
    %30 = arith.addf %28, %29 : vector<8x32xf32>
    %31 = math.tanh %30 : vector<8x32xf32>
    %32 = arith.mulf %27, %31 : vector<8x32xf32>
    %33 = tpu.concatenate %32, %12 in 1 : vector<8x32xf32>, vector<8x32xf32> -> vector<8x64xf32>
    %cst_20 = arith.constant dense<0.000000e+00> : vector<8x128xf32>
    %34 = tpu.matmul %33, %8, %cst_20 {dimension_numbers = #tpu.dot_dimension_numbers<[1], [0], [0], [1], [0, 0, 1, 1], [], []>} : vector<8x64xf32>, vector<64x128xf32>, vector<8x128xf32> -> vector<8x128xf32>
    %35 = arith.addf %34, %11 : vector<8x128xf32>
    %cst_21 = arith.constant 5.000000e-01 : f32
    %36 = vector.broadcast %cst_21 : f32 to vector<8x128xf32>
    %37 = arith.mulf %36, %35 : vector<8x128xf32>
    %38 = math.tanh %37 : vector<8x128xf32>
    %cst_22 = arith.constant 5.000000e-01 : f32
    %39 = vector.broadcast %cst_22 : f32 to vector<8x128xf32>
    %40 = arith.mulf %39, %38 : vector<8x128xf32>
    %cst_23 = arith.constant 5.000000e-01 : f32
    %41 = vector.broadcast %cst_23 : f32 to vector<8x128xf32>
    %42 = arith.addf %40, %41 : vector<8x128xf32>
    %43 = math.tanh %35 : vector<8x128xf32>
    %44 = vector.extract_strided_slice %42 {offsets = [0, 0], sizes = [8, 32], strides = [1, 1]} : vector<8x128xf32> to vector<8x32xf32>
    %45 = vector.extract_strided_slice %42 {offsets = [0, 32], sizes = [8, 32], strides = [1, 1]} : vector<8x128xf32> to vector<8x32xf32>
    %46 = vector.extract_strided_slice %43 {offsets = [0, 64], sizes = [8, 32], strides = [1, 1]} : vector<8x128xf32> to vector<8x32xf32>
    %47 = vector.extract_strided_slice %42 {offsets = [0, 96], sizes = [8, 32], strides = [1, 1]} : vector<8x128xf32> to vector<8x32xf32>
    %48 = arith.mulf %45, %12 : vector<8x32xf32>
    %49 = arith.mulf %44, %46 : vector<8x32xf32>
    %50 = arith.addf %48, %49 : vector<8x32xf32>
    %51 = math.tanh %50 : vector<8x32xf32>
    %52 = arith.mulf %47, %51 : vector<8x32xf32>
    %c8 = arith.constant 8 : index
    %c0_24 = arith.constant 0 : index
    %53 = vector.load %arg11[%c8, %c0_24] : memref<64x128xf32, #tpu.memory_space<vmem>>, vector<8x128xf32>
    %cst_25 = arith.constant dense<0.000000e+00> : vector<8x128xf32>
    %54 = tpu.matmul %32, %7, %cst_25 {dimension_numbers = #tpu.dot_dimension_numbers<[1], [0], [0], [1], [0, 0, 1, 1], [], []>} : vector<8x32xf32>, vector<32x128xf32>, vector<8x128xf32> -> vector<8x128xf32>
    %55 = arith.addf %53, %54 : vector<8x128xf32>
    %cst_26 = arith.constant 5.000000e-01 : f32
    %56 = vector.broadcast %cst_26 : f32 to vector<8x128xf32>
    %57 = arith.mulf %56, %55 : vector<8x128xf32>
    %58 = math.tanh %57 : vector<8x128xf32>
    %cst_27 = arith.constant 5.000000e-01 : f32
    %59 = vector.broadcast %cst_27 : f32 to vector<8x128xf32>
    %60 = arith.mulf %59, %58 : vector<8x128xf32>
    %cst_28 = arith.constant 5.000000e-01 : f32
    %61 = vector.broadcast %cst_28 : f32 to vector<8x128xf32>
    %62 = arith.addf %60, %61 : vector<8x128xf32>
    %63 = math.tanh %55 : vector<8x128xf32>
    %64 = vector.extract_strided_slice %62 {offsets = [0, 0], sizes = [8, 32], strides = [1, 1]} : vector<8x128xf32> to vector<8x32xf32>
    %65 = vector.extract_strided_slice %62 {offsets = [0, 32], sizes = [8, 32], strides = [1, 1]} : vector<8x128xf32> to vector<8x32xf32>
    %66 = vector.extract_strided_slice %63 {offsets = [0, 64], sizes = [8, 32], strides = [1, 1]} : vector<8x128xf32> to vector<8x32xf32>
    %67 = vector.extract_strided_slice %62 {offsets = [0, 96], sizes = [8, 32], strides = [1, 1]} : vector<8x128xf32> to vector<8x32xf32>
    %68 = arith.mulf %65, %30 : vector<8x32xf32>
    %69 = arith.mulf %64, %66 : vector<8x32xf32>
    %70 = arith.addf %68, %69 : vector<8x32xf32>
    %71 = math.tanh %70 : vector<8x32xf32>
    %72 = arith.mulf %67, %71 : vector<8x32xf32>
    %73 = tpu.concatenate %72, %52 in 1 : vector<8x32xf32>, vector<8x32xf32> -> vector<8x64xf32>
    %cst_29 = arith.constant dense<0.000000e+00> : vector<8x128xf32>
    %74 = tpu.matmul %73, %8, %cst_29 {dimension_numbers = #tpu.dot_dimension_numbers<[1], [0], [0], [1], [0, 0, 1, 1], [], []>} : vector<8x64xf32>, vector<64x128xf32>, vector<8x128xf32> -> vector<8x128xf32>
    %75 = arith.addf %74, %11 : vector<8x128xf32>
    %cst_30 = arith.constant 5.000000e-01 : f32
    %76 = vector.broadcast %cst_30 : f32 to vector<8x128xf32>
    %77 = arith.mulf %76, %75 : vector<8x128xf32>
    %78 = math.tanh %77 : vector<8x128xf32>
    %cst_31 = arith.constant 5.000000e-01 : f32
    %79 = vector.broadcast %cst_31 : f32 to vector<8x128xf32>
    %80 = arith.mulf %79, %78 : vector<8x128xf32>
    %cst_32 = arith.constant 5.000000e-01 : f32
    %81 = vector.broadcast %cst_32 : f32 to vector<8x128xf32>
    %82 = arith.addf %80, %81 : vector<8x128xf32>
    %83 = math.tanh %75 : vector<8x128xf32>
    %84 = vector.extract_strided_slice %82 {offsets = [0, 0], sizes = [8, 32], strides = [1, 1]} : vector<8x128xf32> to vector<8x32xf32>
    %85 = vector.extract_strided_slice %82 {offsets = [0, 32], sizes = [8, 32], strides = [1, 1]} : vector<8x128xf32> to vector<8x32xf32>
    %86 = vector.extract_strided_slice %83 {offsets = [0, 64], sizes = [8, 32], strides = [1, 1]} : vector<8x128xf32> to vector<8x32xf32>
    %87 = vector.extract_strided_slice %82 {offsets = [0, 96], sizes = [8, 32], strides = [1, 1]} : vector<8x128xf32> to vector<8x32xf32>
    %88 = arith.mulf %85, %50 : vector<8x32xf32>
    %89 = arith.mulf %84, %86 : vector<8x32xf32>
    %90 = arith.addf %88, %89 : vector<8x32xf32>
    %91 = math.tanh %90 : vector<8x32xf32>
    %92 = arith.mulf %87, %91 : vector<8x32xf32>
    %c16 = arith.constant 16 : index
    %c0_33 = arith.constant 0 : index
    %93 = vector.load %arg11[%c16, %c0_33] : memref<64x128xf32, #tpu.memory_space<vmem>>, vector<8x128xf32>
    %cst_34 = arith.constant dense<0.000000e+00> : vector<8x128xf32>
    %94 = tpu.matmul %72, %7, %cst_34 {dimension_numbers = #tpu.dot_dimension_numbers<[1], [0], [0], [1], [0, 0, 1, 1], [], []>} : vector<8x32xf32>, vector<32x128xf32>, vector<8x128xf32> -> vector<8x128xf32>
    %95 = arith.addf %93, %94 : vector<8x128xf32>
    %cst_35 = arith.constant 5.000000e-01 : f32
    %96 = vector.broadcast %cst_35 : f32 to vector<8x128xf32>
    %97 = arith.mulf %96, %95 : vector<8x128xf32>
    %98 = math.tanh %97 : vector<8x128xf32>
    %cst_36 = arith.constant 5.000000e-01 : f32
    %99 = vector.broadcast %cst_36 : f32 to vector<8x128xf32>
    %100 = arith.mulf %99, %98 : vector<8x128xf32>
    %cst_37 = arith.constant 5.000000e-01 : f32
    %101 = vector.broadcast %cst_37 : f32 to vector<8x128xf32>
    %102 = arith.addf %100, %101 : vector<8x128xf32>
    %103 = math.tanh %95 : vector<8x128xf32>
    %104 = vector.extract_strided_slice %102 {offsets = [0, 0], sizes = [8, 32], strides = [1, 1]} : vector<8x128xf32> to vector<8x32xf32>
    %105 = vector.extract_strided_slice %102 {offsets = [0, 32], sizes = [8, 32], strides = [1, 1]} : vector<8x128xf32> to vector<8x32xf32>
    %106 = vector.extract_strided_slice %103 {offsets = [0, 64], sizes = [8, 32], strides = [1, 1]} : vector<8x128xf32> to vector<8x32xf32>
    %107 = vector.extract_strided_slice %102 {offsets = [0, 96], sizes = [8, 32], strides = [1, 1]} : vector<8x128xf32> to vector<8x32xf32>
    %108 = arith.mulf %105, %70 : vector<8x32xf32>
    %109 = arith.mulf %104, %106 : vector<8x32xf32>
    %110 = arith.addf %108, %109 : vector<8x32xf32>
    %111 = math.tanh %110 : vector<8x32xf32>
    %112 = arith.mulf %107, %111 : vector<8x32xf32>
    %113 = tpu.concatenate %112, %92 in 1 : vector<8x32xf32>, vector<8x32xf32> -> vector<8x64xf32>
    %cst_38 = arith.constant dense<0.000000e+00> : vector<8x128xf32>
    %114 = tpu.matmul %113, %8, %cst_38 {dimension_numbers = #tpu.dot_dimension_numbers<[1], [0], [0], [1], [0, 0, 1, 1], [], []>} : vector<8x64xf32>, vector<64x128xf32>, vector<8x128xf32> -> vector<8x128xf32>
    %115 = arith.addf %114, %11 : vector<8x128xf32>
    %cst_39 = arith.constant 5.000000e-01 : f32
    %116 = vector.broadcast %cst_39 : f32 to vector<8x128xf32>
    %117 = arith.mulf %116, %115 : vector<8x128xf32>
    %118 = math.tanh %117 : vector<8x128xf32>
    %cst_40 = arith.constant 5.000000e-01 : f32
    %119 = vector.broadcast %cst_40 : f32 to vector<8x128xf32>
    %120 = arith.mulf %119, %118 : vector<8x128xf32>
    %cst_41 = arith.constant 5.000000e-01 : f32
    %121 = vector.broadcast %cst_41 : f32 to vector<8x128xf32>
    %122 = arith.addf %120, %121 : vector<8x128xf32>
    %123 = math.tanh %115 : vector<8x128xf32>
    %124 = vector.extract_strided_slice %122 {offsets = [0, 0], sizes = [8, 32], strides = [1, 1]} : vector<8x128xf32> to vector<8x32xf32>
    %125 = vector.extract_strided_slice %122 {offsets = [0, 32], sizes = [8, 32], strides = [1, 1]} : vector<8x128xf32> to vector<8x32xf32>
    %126 = vector.extract_strided_slice %123 {offsets = [0, 64], sizes = [8, 32], strides = [1, 1]} : vector<8x128xf32> to vector<8x32xf32>
    %127 = vector.extract_strided_slice %122 {offsets = [0, 96], sizes = [8, 32], strides = [1, 1]} : vector<8x128xf32> to vector<8x32xf32>
    %128 = arith.mulf %125, %90 : vector<8x32xf32>
    %129 = arith.mulf %124, %126 : vector<8x32xf32>
    %130 = arith.addf %128, %129 : vector<8x32xf32>
    %131 = math.tanh %130 : vector<8x32xf32>
    %132 = arith.mulf %127, %131 : vector<8x32xf32>
    %c24 = arith.constant 24 : index
    %c0_42 = arith.constant 0 : index
    %133 = vector.load %arg11[%c24, %c0_42] : memref<64x128xf32, #tpu.memory_space<vmem>>, vector<8x128xf32>
    %cst_43 = arith.constant dense<0.000000e+00> : vector<8x128xf32>
    %134 = tpu.matmul %112, %7, %cst_43 {dimension_numbers = #tpu.dot_dimension_numbers<[1], [0], [0], [1], [0, 0, 1, 1], [], []>} : vector<8x32xf32>, vector<32x128xf32>, vector<8x128xf32> -> vector<8x128xf32>
    %135 = arith.addf %133, %134 : vector<8x128xf32>
    %cst_44 = arith.constant 5.000000e-01 : f32
    %136 = vector.broadcast %cst_44 : f32 to vector<8x128xf32>
    %137 = arith.mulf %136, %135 : vector<8x128xf32>
    %138 = math.tanh %137 : vector<8x128xf32>
    %cst_45 = arith.constant 5.000000e-01 : f32
    %139 = vector.broadcast %cst_45 : f32 to vector<8x128xf32>
    %140 = arith.mulf %139, %138 : vector<8x128xf32>
    %cst_46 = arith.constant 5.000000e-01 : f32
    %141 = vector.broadcast %cst_46 : f32 to vector<8x128xf32>
    %142 = arith.addf %140, %141 : vector<8x128xf32>
    %143 = math.tanh %135 : vector<8x128xf32>
    %144 = vector.extract_strided_slice %142 {offsets = [0, 0], sizes = [8, 32], strides = [1, 1]} : vector<8x128xf32> to vector<8x32xf32>
    %145 = vector.extract_strided_slice %142 {offsets = [0, 32], sizes = [8, 32], strides = [1, 1]} : vector<8x128xf32> to vector<8x32xf32>
    %146 = vector.extract_strided_slice %143 {offsets = [0, 64], sizes = [8, 32], strides = [1, 1]} : vector<8x128xf32> to vector<8x32xf32>
    %147 = vector.extract_strided_slice %142 {offsets = [0, 96], sizes = [8, 32], strides = [1, 1]} : vector<8x128xf32> to vector<8x32xf32>
    %148 = arith.mulf %145, %110 : vector<8x32xf32>
    %149 = arith.mulf %144, %146 : vector<8x32xf32>
    %150 = arith.addf %148, %149 : vector<8x32xf32>
    %151 = math.tanh %150 : vector<8x32xf32>
    %152 = arith.mulf %147, %151 : vector<8x32xf32>
    %153 = tpu.concatenate %152, %132 in 1 : vector<8x32xf32>, vector<8x32xf32> -> vector<8x64xf32>
    %cst_47 = arith.constant dense<0.000000e+00> : vector<8x128xf32>
    %154 = tpu.matmul %153, %8, %cst_47 {dimension_numbers = #tpu.dot_dimension_numbers<[1], [0], [0], [1], [0, 0, 1, 1], [], []>} : vector<8x64xf32>, vector<64x128xf32>, vector<8x128xf32> -> vector<8x128xf32>
    %155 = arith.addf %154, %11 : vector<8x128xf32>
    %cst_48 = arith.constant 5.000000e-01 : f32
    %156 = vector.broadcast %cst_48 : f32 to vector<8x128xf32>
    %157 = arith.mulf %156, %155 : vector<8x128xf32>
    %158 = math.tanh %157 : vector<8x128xf32>
    %cst_49 = arith.constant 5.000000e-01 : f32
    %159 = vector.broadcast %cst_49 : f32 to vector<8x128xf32>
    %160 = arith.mulf %159, %158 : vector<8x128xf32>
    %cst_50 = arith.constant 5.000000e-01 : f32
    %161 = vector.broadcast %cst_50 : f32 to vector<8x128xf32>
    %162 = arith.addf %160, %161 : vector<8x128xf32>
    %163 = math.tanh %155 : vector<8x128xf32>
    %164 = vector.extract_strided_slice %162 {offsets = [0, 0], sizes = [8, 32], strides = [1, 1]} : vector<8x128xf32> to vector<8x32xf32>
    %165 = vector.extract_strided_slice %162 {offsets = [0, 32], sizes = [8, 32], strides = [1, 1]} : vector<8x128xf32> to vector<8x32xf32>
    %166 = vector.extract_strided_slice %163 {offsets = [0, 64], sizes = [8, 32], strides = [1, 1]} : vector<8x128xf32> to vector<8x32xf32>
    %167 = vector.extract_strided_slice %162 {offsets = [0, 96], sizes = [8, 32], strides = [1, 1]} : vector<8x128xf32> to vector<8x32xf32>
    %168 = arith.mulf %165, %130 : vector<8x32xf32>
    %169 = arith.mulf %164, %166 : vector<8x32xf32>
    %170 = arith.addf %168, %169 : vector<8x32xf32>
    %171 = math.tanh %170 : vector<8x32xf32>
    %172 = arith.mulf %167, %171 : vector<8x32xf32>
    %c32 = arith.constant 32 : index
    %c0_51 = arith.constant 0 : index
    %173 = vector.load %arg11[%c32, %c0_51] : memref<64x128xf32, #tpu.memory_space<vmem>>, vector<8x128xf32>
    %cst_52 = arith.constant dense<0.000000e+00> : vector<8x128xf32>
    %174 = tpu.matmul %152, %7, %cst_52 {dimension_numbers = #tpu.dot_dimension_numbers<[1], [0], [0], [1], [0, 0, 1, 1], [], []>} : vector<8x32xf32>, vector<32x128xf32>, vector<8x128xf32> -> vector<8x128xf32>
    %175 = arith.addf %173, %174 : vector<8x128xf32>
    %cst_53 = arith.constant 5.000000e-01 : f32
    %176 = vector.broadcast %cst_53 : f32 to vector<8x128xf32>
    %177 = arith.mulf %176, %175 : vector<8x128xf32>
    %178 = math.tanh %177 : vector<8x128xf32>
    %cst_54 = arith.constant 5.000000e-01 : f32
    %179 = vector.broadcast %cst_54 : f32 to vector<8x128xf32>
    %180 = arith.mulf %179, %178 : vector<8x128xf32>
    %cst_55 = arith.constant 5.000000e-01 : f32
    %181 = vector.broadcast %cst_55 : f32 to vector<8x128xf32>
    %182 = arith.addf %180, %181 : vector<8x128xf32>
    %183 = math.tanh %175 : vector<8x128xf32>
    %184 = vector.extract_strided_slice %182 {offsets = [0, 0], sizes = [8, 32], strides = [1, 1]} : vector<8x128xf32> to vector<8x32xf32>
    %185 = vector.extract_strided_slice %182 {offsets = [0, 32], sizes = [8, 32], strides = [1, 1]} : vector<8x128xf32> to vector<8x32xf32>
    %186 = vector.extract_strided_slice %183 {offsets = [0, 64], sizes = [8, 32], strides = [1, 1]} : vector<8x128xf32> to vector<8x32xf32>
    %187 = vector.extract_strided_slice %182 {offsets = [0, 96], sizes = [8, 32], strides = [1, 1]} : vector<8x128xf32> to vector<8x32xf32>
    %188 = arith.mulf %185, %150 : vector<8x32xf32>
    %189 = arith.mulf %184, %186 : vector<8x32xf32>
    %190 = arith.addf %188, %189 : vector<8x32xf32>
    %191 = math.tanh %190 : vector<8x32xf32>
    %192 = arith.mulf %187, %191 : vector<8x32xf32>
    %193 = tpu.concatenate %192, %172 in 1 : vector<8x32xf32>, vector<8x32xf32> -> vector<8x64xf32>
    %cst_56 = arith.constant dense<0.000000e+00> : vector<8x128xf32>
    %194 = tpu.matmul %193, %8, %cst_56 {dimension_numbers = #tpu.dot_dimension_numbers<[1], [0], [0], [1], [0, 0, 1, 1], [], []>} : vector<8x64xf32>, vector<64x128xf32>, vector<8x128xf32> -> vector<8x128xf32>
    %195 = arith.addf %194, %11 : vector<8x128xf32>
    %cst_57 = arith.constant 5.000000e-01 : f32
    %196 = vector.broadcast %cst_57 : f32 to vector<8x128xf32>
    %197 = arith.mulf %196, %195 : vector<8x128xf32>
    %198 = math.tanh %197 : vector<8x128xf32>
    %cst_58 = arith.constant 5.000000e-01 : f32
    %199 = vector.broadcast %cst_58 : f32 to vector<8x128xf32>
    %200 = arith.mulf %199, %198 : vector<8x128xf32>
    %cst_59 = arith.constant 5.000000e-01 : f32
    %201 = vector.broadcast %cst_59 : f32 to vector<8x128xf32>
    %202 = arith.addf %200, %201 : vector<8x128xf32>
    %203 = math.tanh %195 : vector<8x128xf32>
    %204 = vector.extract_strided_slice %202 {offsets = [0, 0], sizes = [8, 32], strides = [1, 1]} : vector<8x128xf32> to vector<8x32xf32>
    %205 = vector.extract_strided_slice %202 {offsets = [0, 32], sizes = [8, 32], strides = [1, 1]} : vector<8x128xf32> to vector<8x32xf32>
    %206 = vector.extract_strided_slice %203 {offsets = [0, 64], sizes = [8, 32], strides = [1, 1]} : vector<8x128xf32> to vector<8x32xf32>
    %207 = vector.extract_strided_slice %202 {offsets = [0, 96], sizes = [8, 32], strides = [1, 1]} : vector<8x128xf32> to vector<8x32xf32>
    %208 = arith.mulf %205, %170 : vector<8x32xf32>
    %209 = arith.mulf %204, %206 : vector<8x32xf32>
    %210 = arith.addf %208, %209 : vector<8x32xf32>
    %211 = math.tanh %210 : vector<8x32xf32>
    %212 = arith.mulf %207, %211 : vector<8x32xf32>
    %c40 = arith.constant 40 : index
    %c0_60 = arith.constant 0 : index
    %213 = vector.load %arg11[%c40, %c0_60] : memref<64x128xf32, #tpu.memory_space<vmem>>, vector<8x128xf32>
    %cst_61 = arith.constant dense<0.000000e+00> : vector<8x128xf32>
    %214 = tpu.matmul %192, %7, %cst_61 {dimension_numbers = #tpu.dot_dimension_numbers<[1], [0], [0], [1], [0, 0, 1, 1], [], []>} : vector<8x32xf32>, vector<32x128xf32>, vector<8x128xf32> -> vector<8x128xf32>
    %215 = arith.addf %213, %214 : vector<8x128xf32>
    %cst_62 = arith.constant 5.000000e-01 : f32
    %216 = vector.broadcast %cst_62 : f32 to vector<8x128xf32>
    %217 = arith.mulf %216, %215 : vector<8x128xf32>
    %218 = math.tanh %217 : vector<8x128xf32>
    %cst_63 = arith.constant 5.000000e-01 : f32
    %219 = vector.broadcast %cst_63 : f32 to vector<8x128xf32>
    %220 = arith.mulf %219, %218 : vector<8x128xf32>
    %cst_64 = arith.constant 5.000000e-01 : f32
    %221 = vector.broadcast %cst_64 : f32 to vector<8x128xf32>
    %222 = arith.addf %220, %221 : vector<8x128xf32>
    %223 = math.tanh %215 : vector<8x128xf32>
    %224 = vector.extract_strided_slice %222 {offsets = [0, 0], sizes = [8, 32], strides = [1, 1]} : vector<8x128xf32> to vector<8x32xf32>
    %225 = vector.extract_strided_slice %222 {offsets = [0, 32], sizes = [8, 32], strides = [1, 1]} : vector<8x128xf32> to vector<8x32xf32>
    %226 = vector.extract_strided_slice %223 {offsets = [0, 64], sizes = [8, 32], strides = [1, 1]} : vector<8x128xf32> to vector<8x32xf32>
    %227 = vector.extract_strided_slice %222 {offsets = [0, 96], sizes = [8, 32], strides = [1, 1]} : vector<8x128xf32> to vector<8x32xf32>
    %228 = arith.mulf %225, %190 : vector<8x32xf32>
    %229 = arith.mulf %224, %226 : vector<8x32xf32>
    %230 = arith.addf %228, %229 : vector<8x32xf32>
    %231 = math.tanh %230 : vector<8x32xf32>
    %232 = arith.mulf %227, %231 : vector<8x32xf32>
    %233 = tpu.concatenate %232, %212 in 1 : vector<8x32xf32>, vector<8x32xf32> -> vector<8x64xf32>
    %cst_65 = arith.constant dense<0.000000e+00> : vector<8x128xf32>
    %234 = tpu.matmul %233, %8, %cst_65 {dimension_numbers = #tpu.dot_dimension_numbers<[1], [0], [0], [1], [0, 0, 1, 1], [], []>} : vector<8x64xf32>, vector<64x128xf32>, vector<8x128xf32> -> vector<8x128xf32>
    %235 = arith.addf %234, %11 : vector<8x128xf32>
    %cst_66 = arith.constant 5.000000e-01 : f32
    %236 = vector.broadcast %cst_66 : f32 to vector<8x128xf32>
    %237 = arith.mulf %236, %235 : vector<8x128xf32>
    %238 = math.tanh %237 : vector<8x128xf32>
    %cst_67 = arith.constant 5.000000e-01 : f32
    %239 = vector.broadcast %cst_67 : f32 to vector<8x128xf32>
    %240 = arith.mulf %239, %238 : vector<8x128xf32>
    %cst_68 = arith.constant 5.000000e-01 : f32
    %241 = vector.broadcast %cst_68 : f32 to vector<8x128xf32>
    %242 = arith.addf %240, %241 : vector<8x128xf32>
    %243 = math.tanh %235 : vector<8x128xf32>
    %244 = vector.extract_strided_slice %242 {offsets = [0, 0], sizes = [8, 32], strides = [1, 1]} : vector<8x128xf32> to vector<8x32xf32>
    %245 = vector.extract_strided_slice %242 {offsets = [0, 32], sizes = [8, 32], strides = [1, 1]} : vector<8x128xf32> to vector<8x32xf32>
    %246 = vector.extract_strided_slice %243 {offsets = [0, 64], sizes = [8, 32], strides = [1, 1]} : vector<8x128xf32> to vector<8x32xf32>
    %247 = vector.extract_strided_slice %242 {offsets = [0, 96], sizes = [8, 32], strides = [1, 1]} : vector<8x128xf32> to vector<8x32xf32>
    %248 = arith.mulf %245, %210 : vector<8x32xf32>
    %249 = arith.mulf %244, %246 : vector<8x32xf32>
    %250 = arith.addf %248, %249 : vector<8x32xf32>
    %251 = math.tanh %250 : vector<8x32xf32>
    %252 = arith.mulf %247, %251 : vector<8x32xf32>
    %c48 = arith.constant 48 : index
    %c0_69 = arith.constant 0 : index
    %253 = vector.load %arg11[%c48, %c0_69] : memref<64x128xf32, #tpu.memory_space<vmem>>, vector<8x128xf32>
    %cst_70 = arith.constant dense<0.000000e+00> : vector<8x128xf32>
    %254 = tpu.matmul %232, %7, %cst_70 {dimension_numbers = #tpu.dot_dimension_numbers<[1], [0], [0], [1], [0, 0, 1, 1], [], []>} : vector<8x32xf32>, vector<32x128xf32>, vector<8x128xf32> -> vector<8x128xf32>
    %255 = arith.addf %253, %254 : vector<8x128xf32>
    %cst_71 = arith.constant 5.000000e-01 : f32
    %256 = vector.broadcast %cst_71 : f32 to vector<8x128xf32>
    %257 = arith.mulf %256, %255 : vector<8x128xf32>
    %258 = math.tanh %257 : vector<8x128xf32>
    %cst_72 = arith.constant 5.000000e-01 : f32
    %259 = vector.broadcast %cst_72 : f32 to vector<8x128xf32>
    %260 = arith.mulf %259, %258 : vector<8x128xf32>
    %cst_73 = arith.constant 5.000000e-01 : f32
    %261 = vector.broadcast %cst_73 : f32 to vector<8x128xf32>
    %262 = arith.addf %260, %261 : vector<8x128xf32>
    %263 = math.tanh %255 : vector<8x128xf32>
    %264 = vector.extract_strided_slice %262 {offsets = [0, 0], sizes = [8, 32], strides = [1, 1]} : vector<8x128xf32> to vector<8x32xf32>
    %265 = vector.extract_strided_slice %262 {offsets = [0, 32], sizes = [8, 32], strides = [1, 1]} : vector<8x128xf32> to vector<8x32xf32>
    %266 = vector.extract_strided_slice %263 {offsets = [0, 64], sizes = [8, 32], strides = [1, 1]} : vector<8x128xf32> to vector<8x32xf32>
    %267 = vector.extract_strided_slice %262 {offsets = [0, 96], sizes = [8, 32], strides = [1, 1]} : vector<8x128xf32> to vector<8x32xf32>
    %268 = arith.mulf %265, %230 : vector<8x32xf32>
    %269 = arith.mulf %264, %266 : vector<8x32xf32>
    %270 = arith.addf %268, %269 : vector<8x32xf32>
    %271 = math.tanh %270 : vector<8x32xf32>
    %272 = arith.mulf %267, %271 : vector<8x32xf32>
    %273 = tpu.concatenate %272, %252 in 1 : vector<8x32xf32>, vector<8x32xf32> -> vector<8x64xf32>
    %cst_74 = arith.constant dense<0.000000e+00> : vector<8x128xf32>
    %274 = tpu.matmul %273, %8, %cst_74 {dimension_numbers = #tpu.dot_dimension_numbers<[1], [0], [0], [1], [0, 0, 1, 1], [], []>} : vector<8x64xf32>, vector<64x128xf32>, vector<8x128xf32> -> vector<8x128xf32>
    %275 = arith.addf %274, %11 : vector<8x128xf32>
    %cst_75 = arith.constant 5.000000e-01 : f32
    %276 = vector.broadcast %cst_75 : f32 to vector<8x128xf32>
    %277 = arith.mulf %276, %275 : vector<8x128xf32>
    %278 = math.tanh %277 : vector<8x128xf32>
    %cst_76 = arith.constant 5.000000e-01 : f32
    %279 = vector.broadcast %cst_76 : f32 to vector<8x128xf32>
    %280 = arith.mulf %279, %278 : vector<8x128xf32>
    %cst_77 = arith.constant 5.000000e-01 : f32
    %281 = vector.broadcast %cst_77 : f32 to vector<8x128xf32>
    %282 = arith.addf %280, %281 : vector<8x128xf32>
    %283 = math.tanh %275 : vector<8x128xf32>
    %284 = vector.extract_strided_slice %282 {offsets = [0, 0], sizes = [8, 32], strides = [1, 1]} : vector<8x128xf32> to vector<8x32xf32>
    %285 = vector.extract_strided_slice %282 {offsets = [0, 32], sizes = [8, 32], strides = [1, 1]} : vector<8x128xf32> to vector<8x32xf32>
    %286 = vector.extract_strided_slice %283 {offsets = [0, 64], sizes = [8, 32], strides = [1, 1]} : vector<8x128xf32> to vector<8x32xf32>
    %287 = vector.extract_strided_slice %282 {offsets = [0, 96], sizes = [8, 32], strides = [1, 1]} : vector<8x128xf32> to vector<8x32xf32>
    %288 = arith.mulf %285, %250 : vector<8x32xf32>
    %289 = arith.mulf %284, %286 : vector<8x32xf32>
    %290 = arith.addf %288, %289 : vector<8x32xf32>
    %291 = math.tanh %290 : vector<8x32xf32>
    %292 = arith.mulf %287, %291 : vector<8x32xf32>
    %c56 = arith.constant 56 : index
    %c0_78 = arith.constant 0 : index
    %293 = vector.load %arg11[%c56, %c0_78] : memref<64x128xf32, #tpu.memory_space<vmem>>, vector<8x128xf32>
    %cst_79 = arith.constant dense<0.000000e+00> : vector<8x128xf32>
    %294 = tpu.matmul %272, %7, %cst_79 {dimension_numbers = #tpu.dot_dimension_numbers<[1], [0], [0], [1], [0, 0, 1, 1], [], []>} : vector<8x32xf32>, vector<32x128xf32>, vector<8x128xf32> -> vector<8x128xf32>
    %295 = arith.addf %293, %294 : vector<8x128xf32>
    %cst_80 = arith.constant 5.000000e-01 : f32
    %296 = vector.broadcast %cst_80 : f32 to vector<8x128xf32>
    %297 = arith.mulf %296, %295 : vector<8x128xf32>
    %298 = math.tanh %297 : vector<8x128xf32>
    %cst_81 = arith.constant 5.000000e-01 : f32
    %299 = vector.broadcast %cst_81 : f32 to vector<8x128xf32>
    %300 = arith.mulf %299, %298 : vector<8x128xf32>
    %cst_82 = arith.constant 5.000000e-01 : f32
    %301 = vector.broadcast %cst_82 : f32 to vector<8x128xf32>
    %302 = arith.addf %300, %301 : vector<8x128xf32>
    %303 = math.tanh %295 : vector<8x128xf32>
    %304 = vector.extract_strided_slice %302 {offsets = [0, 0], sizes = [8, 32], strides = [1, 1]} : vector<8x128xf32> to vector<8x32xf32>
    %305 = vector.extract_strided_slice %302 {offsets = [0, 32], sizes = [8, 32], strides = [1, 1]} : vector<8x128xf32> to vector<8x32xf32>
    %306 = vector.extract_strided_slice %303 {offsets = [0, 64], sizes = [8, 32], strides = [1, 1]} : vector<8x128xf32> to vector<8x32xf32>
    %307 = vector.extract_strided_slice %302 {offsets = [0, 96], sizes = [8, 32], strides = [1, 1]} : vector<8x128xf32> to vector<8x32xf32>
    %308 = arith.mulf %305, %270 : vector<8x32xf32>
    %309 = arith.mulf %304, %306 : vector<8x32xf32>
    %310 = arith.addf %308, %309 : vector<8x32xf32>
    %311 = math.tanh %310 : vector<8x32xf32>
    %312 = arith.mulf %307, %311 : vector<8x32xf32>
    %313 = tpu.concatenate %312, %292 in 1 : vector<8x32xf32>, vector<8x32xf32> -> vector<8x64xf32>
    %cst_83 = arith.constant dense<0.000000e+00> : vector<8x128xf32>
    %314 = tpu.matmul %313, %8, %cst_83 {dimension_numbers = #tpu.dot_dimension_numbers<[1], [0], [0], [1], [0, 0, 1, 1], [], []>} : vector<8x64xf32>, vector<64x128xf32>, vector<8x128xf32> -> vector<8x128xf32>
    %315 = arith.addf %314, %11 : vector<8x128xf32>
    %cst_84 = arith.constant 5.000000e-01 : f32
    %316 = vector.broadcast %cst_84 : f32 to vector<8x128xf32>
    %317 = arith.mulf %316, %315 : vector<8x128xf32>
    %318 = math.tanh %317 : vector<8x128xf32>
    %cst_85 = arith.constant 5.000000e-01 : f32
    %319 = vector.broadcast %cst_85 : f32 to vector<8x128xf32>
    %320 = arith.mulf %319, %318 : vector<8x128xf32>
    %cst_86 = arith.constant 5.000000e-01 : f32
    %321 = vector.broadcast %cst_86 : f32 to vector<8x128xf32>
    %322 = arith.addf %320, %321 : vector<8x128xf32>
    %323 = math.tanh %315 : vector<8x128xf32>
    %324 = vector.extract_strided_slice %322 {offsets = [0, 0], sizes = [8, 32], strides = [1, 1]} : vector<8x128xf32> to vector<8x32xf32>
    %325 = vector.extract_strided_slice %322 {offsets = [0, 32], sizes = [8, 32], strides = [1, 1]} : vector<8x128xf32> to vector<8x32xf32>
    %326 = vector.extract_strided_slice %323 {offsets = [0, 64], sizes = [8, 32], strides = [1, 1]} : vector<8x128xf32> to vector<8x32xf32>
    %327 = vector.extract_strided_slice %322 {offsets = [0, 96], sizes = [8, 32], strides = [1, 1]} : vector<8x128xf32> to vector<8x32xf32>
    %328 = arith.mulf %325, %290 : vector<8x32xf32>
    %329 = arith.mulf %324, %326 : vector<8x32xf32>
    %330 = arith.addf %328, %329 : vector<8x32xf32>
    %331 = math.tanh %330 : vector<8x32xf32>
    %332 = arith.mulf %327, %331 : vector<8x32xf32>
    %c0_87 = arith.constant 0 : index
    %c0_88 = arith.constant 0 : index
    %333 = vector.load %arg6[%c0_87, %c0_88] : memref<32x8xf32, #tpu.memory_space<vmem>>, vector<32x8xf32>
    %cst_89 = arith.constant dense<0.000000e+00> : vector<8x8xf32>
    %334 = tpu.matmul %332, %333, %cst_89 {dimension_numbers = #tpu.dot_dimension_numbers<[1], [0], [0], [1], [0, 0, 1, 1], [], []>} : vector<8x32xf32>, vector<32x8xf32>, vector<8x8xf32> -> vector<8x8xf32>
    %c0_90 = arith.constant 0 : index
    %c0_91 = arith.constant 0 : index
    %335 = vector.load %arg7[%c0_90, %c0_91] : memref<1x8xf32, #tpu.memory_space<vmem>>, vector<1x8xf32>
    %336 = vector.broadcast %335 : vector<1x8xf32> to vector<8x8xf32>
    %337 = arith.addf %334, %336 : vector<8x8xf32>
    %cst_92 = arith.constant 0.000000e+00 : f32
    %338 = vector.broadcast %cst_92 : f32 to vector<8x8xf32>
    %339 = arith.cmpf ogt, %337, %338 : vector<8x8xf32>
    %340 = math.exp %337 : vector<8x8xf32>
    %cst_93 = arith.constant 1.000000e+00 : f32
    %341 = vector.broadcast %cst_93 : f32 to vector<8x8xf32>
    %342 = arith.subf %340, %341 : vector<8x8xf32>
    %cst_94 = arith.constant 2.000000e-01 : f32
    %343 = vector.broadcast %cst_94 : f32 to vector<8x8xf32>
    %344 = arith.mulf %343, %342 : vector<8x8xf32>
    %345 = arith.select %339, %337, %344 : vector<8x8xi1>, vector<8x8xf32>
    %c0_95 = arith.constant 0 : index
    %c0_96 = arith.constant 0 : index
    %346 = vector.load %arg8[%c0_95, %c0_96] : memref<8x2xf32, #tpu.memory_space<vmem>>, vector<8x2xf32>
    %cst_97 = arith.constant dense<0.000000e+00> : vector<8x2xf32>
    %347 = tpu.matmul %345, %346, %cst_97 {dimension_numbers = #tpu.dot_dimension_numbers<[1], [0], [0], [1], [0, 0, 1, 1], [], []>} : vector<8x8xf32>, vector<8x2xf32>, vector<8x2xf32> -> vector<8x2xf32>
    %c0_98 = arith.constant 0 : index
    %c0_99 = arith.constant 0 : index
    %348 = vector.load %arg9[%c0_98, %c0_99] : memref<1x2xf32, #tpu.memory_space<vmem>>, vector<1x2xf32>
    %349 = vector.broadcast %348 : vector<1x2xf32> to vector<8x2xf32>
    %350 = arith.addf %347, %349 : vector<8x2xf32>
    %c0_100 = arith.constant 0 : index
    %c0_101 = arith.constant 0 : index
    %351 = vector.load %arg10[%c0_100, %c0_101] : memref<8x2xf32, #tpu.memory_space<vmem>>, vector<8x2xf32>
    tpu.vector_store %arg10[%c0_100, %c0_101], %350 {strides = array<i32>} : memref<8x2xf32, #tpu.memory_space<vmem>>, vector<8x2xf32>,
    return
  }
}

</mosaic_0001>

<llo_original>
// kernel: lstmdis_forward.1
$region0: #{lstmdis_forward.1}
  #allocation0 [shape = 'u32[]', space=smem, size = 0x4, offset = 0x4, fixed_abs, tag = 'smem constant byte address 0x4 - core index']
  #allocation1 [shape = 'u32[144,128]{1,0:T(1,128)}', space=vmem, size = 0x12000, scoped, tag = 'internal scratch']
  #allocation2 [shape = 'f32[64,128]{1,0:T(8,128)}', space=vmem, size = 0x8000, scoped, tag = 'scratch operand']
  %s0 = inlined_call_operand.vmem [shape: f32[64,4], index: 0, kind: input, shape index: {}]
  %s1 = inlined_call_operand.vmem [shape: f32[4,128], index: 1, kind: input, shape index: {}]
  %s2 = inlined_call_operand.vmem [shape: f32[32,128], index: 2, kind: input, shape index: {}]
  %s3 = inlined_call_operand.vmem [shape: f32[1,128], index: 3, kind: input, shape index: {}]
  %s4 = inlined_call_operand.vmem [shape: f32[64,128], index: 4, kind: input, shape index: {}]
  %s5 = inlined_call_operand.vmem [shape: f32[1,128], index: 5, kind: input, shape index: {}]
  %s6 = inlined_call_operand.vmem [shape: f32[32,8], index: 6, kind: input, shape index: {}]
  %s7 = inlined_call_operand.vmem [shape: f32[1,8], index: 7, kind: input, shape index: {}]
  %s8 = inlined_call_operand.vmem [shape: f32[8,2], index: 8, kind: input, shape index: {}]
  %s9 = inlined_call_operand.vmem [shape: f32[1,2], index: 9, kind: input, shape index: {}]
  %s10 = inlined_call_operand.vmem [shape: f32[8,2], index: 10, kind: output, shape index: {}]
  %s11 = sld [smem:[#allocation0]]
  $region50: #{lstmdis_forward.1} parent=0
    _
  %s13 = ssub.s32 1, %s11
  %s14 = scalar_select 0, %s13, %s11
  // Predicated region
  $region2: #{lstmdis_forward.1} parent=0 // pred_check
    _
  $region3: #{lstmdis_forward.1} parent=0 // pred_check_branch
    %16 = sbr.rel (0) target = $region5
  $region4: #{lstmdis_forward.1} parent=0 // pred_region
    _
  $region5: #{lstmdis_forward.1} parent=0 // pred_fallthru
    _
  // Predicated region
  $region6: #{lstmdis_forward.1} parent=0 // pred_check
    _
  $region7: #{lstmdis_forward.1} parent=0 // pred_check_branch
    %18 = sbr.rel (0) target = $region9
  $region8: #{lstmdis_forward.1} parent=0 // pred_region
    _
  $region9: #{lstmdis_forward.1} parent=0 // pred_fallthru
    _
  // Predicated region
  $region10: #{lstmdis_forward.1} parent=0 // pred_check
    _
  $region11: #{lstmdis_forward.1} parent=0 // pred_check_branch
    %20 = sbr.rel (0) target = $region13
  $region12: #{lstmdis_forward.1} parent=0 // pred_region
    _
  $region13: #{lstmdis_forward.1} parent=0 // pred_fallthru
    _
  // Predicated region
  $region14: #{lstmdis_forward.1} parent=0 // pred_check
    _
  $region15: #{lstmdis_forward.1} parent=0 // pred_check_branch
    %22 = sbr.rel (0) target = $region17
  $region16: #{lstmdis_forward.1} parent=0 // pred_region
    _
  $region17: #{lstmdis_forward.1} parent=0 // pred_fallthru
    _
  // Predicated region
  $region18: #{lstmdis_forward.1} parent=0 // pred_check
    _
  $region19: #{lstmdis_forward.1} parent=0 // pred_check_branch
    %24 = sbr.rel (0) target = $region21
  $region20: #{lstmdis_forward.1} parent=0 // pred_region
    _
  $region21: #{lstmdis_forward.1} parent=0 // pred_fallthru
    _
  // Predicated region
  $region22: #{lstmdis_forward.1} parent=0 // pred_check
    _
  $region23: #{lstmdis_forward.1} parent=0 // pred_check_branch
    %26 = sbr.rel (0) target = $region25
  $region24: #{lstmdis_forward.1} parent=0 // pred_region
    _
  $region25: #{lstmdis_forward.1} parent=0 // pred_fallthru
    _
  // Predicated region
  $region26: #{lstmdis_forward.1} parent=0 // pred_check
    _
  $region27: #{lstmdis_forward.1} parent=0 // pred_check_branch
    %28 = sbr.rel (0) target = $region29
  $region28: #{lstmdis_forward.1} parent=0 // pred_region
    _
  $region29: #{lstmdis_forward.1} parent=0 // pred_fallthru
    _
  // Predicated region
  $region30: #{lstmdis_forward.1} parent=0 // pred_check
    _
  $region31: #{lstmdis_forward.1} parent=0 // pred_check_branch
    %30 = sbr.rel (0) target = $region33
  $region32: #{lstmdis_forward.1} parent=0 // pred_region
    _
  $region33: #{lstmdis_forward.1} parent=0 // pred_fallthru
    _
  // Predicated region
  $region34: #{lstmdis_forward.1} parent=0 // pred_check
    _
  $region35: #{lstmdis_forward.1} parent=0 // pred_check_branch
    %32 = sbr.rel (0) target = $region37
  $region36: #{lstmdis_forward.1} parent=0 // pred_region
    _
  $region37: #{lstmdis_forward.1} parent=0 // pred_fallthru
    _
  // Predicated region
  $region38: #{lstmdis_forward.1} parent=0 // pred_check
    _
  $region39: #{lstmdis_forward.1} parent=0 // pred_check_branch
    %34 = sbr.rel (0) target = $region41
  $region40: #{lstmdis_forward.1} parent=0 // pred_region
    _
  $region41: #{lstmdis_forward.1} parent=0 // pred_fallthru
    _
  %v35 = vld [vmem:[%s0] sm:$0xff]
  %v36 = vld [vmem:[%s0 + $0x8] sm:$0xff]
  %v37 = vld [vmem:[%s0 + $0x10] sm:$0xff]
  %v38 = vld [vmem:[%s0 + $0x18] sm:$0xff]
  %v39 = vld [vmem:[%s0 + $0x20] sm:$0xff]
  %v40 = vld [vmem:[%s0 + $0x28] sm:$0xff]
  %v41 = vld [vmem:[%s0 + $0x30] sm:$0xff]
  %v42 = vld [vmem:[%s0 + $0x38] sm:$0xff]
  %v43 = vld [vmem:[%s1] sm:$0xf]
  %v44 = vld [vmem:[%s3] sm:$0x1]
  %v46 = vlaneseq
  %v47 = vshrl.u32 %v46, 7
  %v48 = vsub.s32 0, %v47
  %v49 = vrot.slane %v44, %v48
  %vm51 = vcmask 31744
  %v53 = vsel %vm51, %v35, 0
  %v56 = vsel %vm51, %v36, 0
  %v59 = vsel %vm51, %v37, 0
  %v62 = vsel %vm51, %v38, 0
  %v65 = vsel %vm51, %v39, 0
  %v68 = vsel %vm51, %v40, 0
  %v71 = vsel %vm51, %v41, 0
  %v74 = vsel %vm51, %v42, 0
  %vm76 = vcmask 1043456
  %v78 = vsel %vm76, %v43, 0
  %80 = vmatprep.subr.mxu0 0.0
  %81 = vmatpush1.msra.mxu0 %v78
  %82 = vmatprep.subr.mxu0 0.0
  %83 = vmatpush1.msra.mxu0 0.0
  %84 = vmatprep.subr.mxu0 0.0
  %85 = vmatpush1.msra.mxu0 0.0
  %86 = vmatprep.subr.mxu0 0.0
  %87 = vmatpush1.msra.mxu0 0.0
  %88 = vmatprep.subr.mxu0 0.0
  %89 = vmatpush1.msra.mxu0 0.0
  %90 = vmatprep.subr.mxu0 0.0
  %91 = vmatpush1.msra.mxu0 0.0
  %92 = vmatprep.subr.mxu0 0.0
  %93 = vmatpush1.msra.mxu0 0.0
  %94 = vmatprep.subr.mxu0 0.0
  %95 = vmatpush1.msra.mxu0 0.0
  %96 = vmatprep.subr.mxu0 0.0
  %97 = vmatpush1.msra.mxu0 0.0
  %98 = vmatprep.subr.mxu0 0.0
  %99 = vmatpush1.msra.mxu0 0.0
  %100 = vmatprep.subr.mxu0 0.0
  %101 = vmatpush1.msra.mxu0 0.0
  %102 = vmatprep.subr.mxu0 0.0
  %103 = vmatpush1.msra.mxu0 0.0
  %104 = vmatprep.subr.mxu0 0.0
  %105 = vmatpush1.msra.mxu0 0.0
  %106 = vmatprep.subr.mxu0 0.0
  %107 = vmatpush1.msra.mxu0 0.0
  %108 = vmatprep.subr.mxu0 0.0
  %109 = vmatpush1.msra.mxu0 0.0
  %110 = vmatprep.subr.mxu0 0.0
  %111 = vmatpush1.msra.mxu0 0.0
  %112 = vmatprep.subr.mxu0 0.0
  %113 = vmatpush1.msra.mxu0 0.0
  %114 = vmatprep.subr.mxu0 0.0
  %115 = vmatpush1.msra.mxu0 0.0
  %116 = vmatprep.subr.mxu0 0.0
  %117 = vmatpush1.msra.mxu0 0.0
  %118 = vmatprep.subr.mxu0 0.0
  %119 = vmatpush1.msra.mxu0 0.0
  %120 = vmatprep.subr.mxu0 0.0
  %121 = vmatpush1.msra.mxu0 0.0
  %122 = vmatprep.subr.mxu0 0.0
  %123 = vmatpush1.msra.mxu0 0.0
  %124 = vmatprep.subr.mxu0 0.0
  %125 = vmatpush1.msra.mxu0 0.0
  %126 = vmatprep.subr.mxu0 0.0
  %127 = vmatpush1.msra.mxu0 0.0
  %128 = vmatprep.subr.mxu0 0.0
  %129 = vmatpush1.msra.mxu0 0.0
  %130 = vmatprep.subr.mxu0 0.0
  %131 = vmatpush1.msra.mxu0 0.0
  %132 = vmatprep.subr.mxu0 0.0
  %133 = vmatpush1.msra.mxu0 0.0
  %134 = vmatprep.subr.mxu0 0.0
  %135 = vmatpush1.msra.mxu0 0.0
  %136 = vmatprep.subr.mxu0 0.0
  %137 = vmatpush1.msra.mxu0 0.0
  %138 = vmatprep.subr.mxu0 0.0
  %139 = vmatpush1.msra.mxu0 0.0
  %140 = vmatprep.subr.mxu0 0.0
  %141 = vmatpush1.msra.mxu0 0.0
  %142 = vmatprep.subr.mxu0 0.0
  %143 = vmatpush1.msra.mxu0 0.0
  %144 = vmatprep.mubr.f32.mxu0 0.0
  %145 = vmatmul.mubr.f32.gmra.mrb[0].mxu0 %v53
  %v146 = vpop.f32.mrb[0].mxu0
  %v147 = vadd.f32 %v49, %v146
  %v148 = vpop.f32.mrb[0].mxu0
  %149 = vmatprep.mubr.f32.mxu0 0.0
  %150 = vmatmul.mubr.f32.gmra.mrb[0].mxu0 %v56
  %v151 = vpop.f32.mrb[0].mxu0
  %v152 = vadd.f32 %v49, %v151
  %v153 = vpop.f32.mrb[0].mxu0
  %154 = vmatprep.mubr.f32.mxu0 0.0
  %155 = vmatmul.mubr.f32.gmra.mrb[0].mxu0 %v59
  %v156 = vpop.f32.mrb[0].mxu0
  %v157 = vadd.f32 %v49, %v156
  %v158 = vpop.f32.mrb[0].mxu0
  %159 = vmatprep.mubr.f32.mxu0 0.0
  %160 = vmatmul.mubr.f32.gmra.mrb[0].mxu0 %v62
  %v161 = vpop.f32.mrb[0].mxu0
  %v162 = vadd.f32 %v49, %v161
  %v163 = vpop.f32.mrb[0].mxu0
  %164 = vmatprep.mubr.f32.mxu0 0.0
  %165 = vmatmul.mubr.f32.gmra.mrb[0].mxu0 %v65
  %v166 = vpop.f32.mrb[0].mxu0
  %v167 = vadd.f32 %v49, %v166
  %v168 = vpop.f32.mrb[0].mxu0
  %169 = vmatprep.mubr.f32.mxu0 0.0
  %170 = vmatmul.mubr.f32.gmra.mrb[0].mxu0 %v68
  %v171 = vpop.f32.mrb[0].mxu0
  %v172 = vadd.f32 %v49, %v171
  %v173 = vpop.f32.mrb[0].mxu0
  %174 = vmatprep.mubr.f32.mxu0 0.0
  %175 = vmatmul.mubr.f32.gmra.mrb[0].mxu0 %v71
  %v176 = vpop.f32.mrb[0].mxu0
  %v177 = vadd.f32 %v49, %v176
  %v178 = vpop.f32.mrb[0].mxu0
  %179 = vmatprep.mubr.f32.mxu0 0.0
  %180 = vmatmul.mubr.f32.gmra.mrb[0].mxu0 %v74
  %v181 = vpop.f32.mrb[0].mxu0
  %v182 = vadd.f32 %v49, %v181
  %v183 = vpop.f32.mrb[0].mxu0
  %184 = vdwg.mxu0
  %185 = vst [vmem:[#allocation2] sm:$0xff] %v147
  %186 = vst [vmem:[#allocation2 + $0x8] sm:$0xff] %v152
  %187 = vst [vmem:[#allocation2 + $0x10] sm:$0xff] %v157
  %188 = vst [vmem:[#allocation2 + $0x18] sm:$0xff] %v162
  %189 = vst [vmem:[#allocation2 + $0x20] sm:$0xff] %v167
  %190 = vst [vmem:[#allocation2 + $0x28] sm:$0xff] %v172
  %191 = vst [vmem:[#allocation2 + $0x30] sm:$0xff] %v177
  %192 = vst [vmem:[#allocation2 + $0x38] sm:$0xff] %v182
  %v193 = vld [vmem:[%s2] sm:$0xff]
  %v194 = vld [vmem:[%s2 + $0x8] sm:$0xff]
  %v195 = vld [vmem:[%s2 + $0x10] sm:$0xff]
  %v196 = vld [vmem:[%s2 + $0x18] sm:$0xff]
  %v197 = vld [vmem:[%s4] sm:$0xff]
  %v198 = vld [vmem:[%s4 + $0x8] sm:$0xff]
  %v199 = vld [vmem:[%s4 + $0x10] sm:$0xff]
  %v200 = vld [vmem:[%s4 + $0x18] sm:$0xff]
  %v201 = vld [vmem:[%s4 + $0x20] sm:$0xff]
  %v202 = vld [vmem:[%s4 + $0x28] sm:$0xff]
  %v203 = vld [vmem:[%s4 + $0x30] sm:$0xff]
  %v204 = vld [vmem:[%s4 + $0x38] sm:$0xff]
  %v205 = vld [vmem:[%s5] sm:$0x1]
  %v207 = vlaneseq
  %v208 = vshrl.u32 %v207, 7
  %v209 = vsub.s32 0, %v208
  %v210 = vrot.slane %v205, %v209
  %v212 = vld [vmem:[#allocation2] sm:$0xff]
  %vm213 = vcmask 261120
  %v215 = vsel %vm213, 0.0, 0
  %217 = vmatprep.subr.mxu0 0.0
  %218 = vmatpush1.msra.mxu0 %v193
  %219 = vmatprep.subr.mxu0 0.0
  %220 = vmatpush1.msra.mxu0 %v194
  %221 = vmatprep.subr.mxu0 0.0
  %222 = vmatpush1.msra.mxu0 %v195
  %223 = vmatprep.subr.mxu0 0.0
  %224 = vmatpush1.msra.mxu0 %v196
  %225 = vmatprep.subr.mxu0 0.0
  %226 = vmatpush1.msra.mxu0 0.0
  %227 = vmatprep.subr.mxu0 0.0
  %228 = vmatpush1.msra.mxu0 0.0
  %229 = vmatprep.subr.mxu0 0.0
  %230 = vmatpush1.msra.mxu0 0.0
  %231 = vmatprep.subr.mxu0 0.0
  %232 = vmatpush1.msra.mxu0 0.0
  %233 = vmatprep.subr.mxu0 0.0
  %234 = vmatpush1.msra.mxu0 0.0
  %235 = vmatprep.subr.mxu0 0.0
  %236 = vmatpush1.msra.mxu0 0.0
  %237 = vmatprep.subr.mxu0 0.0
  %238 = vmatpush1.msra.mxu0 0.0
  %239 = vmatprep.subr.mxu0 0.0
  %240 = vmatpush1.msra.mxu0 0.0
  %241 = vmatprep.subr.mxu0 0.0
  %242 = vmatpush1.msra.mxu0 0.0
  %243 = vmatprep.subr.mxu0 0.0
  %244 = vmatpush1.msra.mxu0 0.0
  %245 = vmatprep.subr.mxu0 0.0
  %246 = vmatpush1.msra.mxu0 0.0
  %247 = vmatprep.subr.mxu0 0.0
  %248 = vmatpush1.msra.mxu0 0.0
  %249 = vmatprep.subr.mxu0 0.0
  %250 = vmatpush1.msra.mxu0 0.0
  %251 = vmatprep.subr.mxu0 0.0
  %252 = vmatpush1.msra.mxu0 0.0
  %253 = vmatprep.subr.mxu0 0.0
  %254 = vmatpush1.msra.mxu0 0.0
  %255 = vmatprep.subr.mxu0 0.0
  %256 = vmatpush1.msra.mxu0 0.0
  %257 = vmatprep.subr.mxu0 0.0
  %258 = vmatpush1.msra.mxu0 0.0
  %259 = vmatprep.subr.mxu0 0.0
  %260 = vmatpush1.msra.mxu0 0.0
  %261 = vmatprep.subr.mxu0 0.0
  %262 = vmatpush1.msra.mxu0 0.0
  %263 = vmatprep.subr.mxu0 0.0
  %264 = vmatpush1.msra.mxu0 0.0
  %265 = vmatprep.subr.mxu0 0.0
  %266 = vmatpush1.msra.mxu0 0.0
  %267 = vmatprep.subr.mxu0 0.0
  %268 = vmatpush1.msra.mxu0 0.0
  %269 = vmatprep.subr.mxu0 0.0
  %270 = vmatpush1.msra.mxu0 0.0
  %271 = vmatprep.subr.mxu0 0.0
  %272 = vmatpush1.msra.mxu0 0.0
  %273 = vmatprep.subr.mxu0 0.0
  %274 = vmatpush1.msra.mxu0 0.0
  %275 = vmatprep.subr.mxu0 0.0
  %276 = vmatpush1.msra.mxu0 0.0
  %277 = vmatprep.subr.mxu0 0.0
  %278 = vmatpush1.msra.mxu0 0.0
  %279 = vmatprep.subr.mxu0 0.0
  %280 = vmatpush1.msra.mxu0 0.0
  %281 = vmatprep.mubr.f32.mxu0 0.0
  %282 = vmatmul.mubr.f32.gmra.mrb[0].mxu0 %v215
  %v283 = vpop.f32.mrb[0].mxu0
  %v284 = vadd.f32 0.0, %v283
  %v285 = vpop.f32.mrb[0].mxu0
  %286 = vdwg.mxu0
  %v287 = vadd.f32 %v212, %v284
  %v288 = vmul.f32 %v287, 0.5
  %v289 = vtanh.pop %v288
  %v290 = vmul.f32 %v289, 0.5
  %v291 = vadd.f32 %v290, 0.5
  %v292 = vtanh.pop %v287
  %v293 = vmul.f32 %v291, 0.0
  %295 = vrot.lane.b32.xlu0 %v292, 64
  %v296 = vpop.permute.xlu0 %295
  %v298 = vmul.f32 %v291, %v296
  %300 = vrot.lane.b32.xlu0 %v298, 32
  %v301 = vpop.permute.xlu0 %300
  %v303 = vadd.f32 %v293, %v301
  %v304 = vtanh.pop %v303
  %306 = vrot.lane.b32.xlu0 %v304, 64
  %v307 = vpop.permute.xlu0 %306
  %v309 = vmul.f32 %v291, %v307
  %311 = vrot.lane.b32.xlu0 %v309, 32
  %v312 = vpop.permute.xlu0 %311
  %v314 = vsel %vm213, %v312, 0.0
  %vm315 = vcmask 523264
  %v317 = vsel %vm315, %v314, 0
  %319 = vmatprep.subr.mxu0 0.0
  %320 = vmatpush1.msra.mxu0 %v197
  %321 = vmatprep.subr.mxu0 0.0
  %322 = vmatpush1.msra.mxu0 %v198
  %323 = vmatprep.subr.mxu0 0.0
  %324 = vmatpush1.msra.mxu0 %v199
  %325 = vmatprep.subr.mxu0 0.0
  %326 = vmatpush1.msra.mxu0 %v200
  %327 = vmatprep.subr.mxu0 0.0
  %328 = vmatpush1.msra.mxu0 %v201
  %329 = vmatprep.subr.mxu0 0.0
  %330 = vmatpush1.msra.mxu0 %v202
  %331 = vmatprep.subr.mxu0 0.0
  %332 = vmatpush1.msra.mxu0 %v203
  %333 = vmatprep.subr.mxu0 0.0
  %334 = vmatpush1.msra.mxu0 %v204
  %335 = vmatprep.subr.mxu0 0.0
  %336 = vmatpush1.msra.mxu0 0.0
  %337 = vmatprep.subr.mxu0 0.0
  %338 = vmatpush1.msra.mxu0 0.0
  %339 = vmatprep.subr.mxu0 0.0
  %340 = vmatpush1.msra.mxu0 0.0
  %341 = vmatprep.subr.mxu0 0.0
  %342 = vmatpush1.msra.mxu0 0.0
  %343 = vmatprep.subr.mxu0 0.0
  %344 = vmatpush1.msra.mxu0 0.0
  %345 = vmatprep.subr.mxu0 0.0
  %346 = vmatpush1.msra.mxu0 0.0
  %347 = vmatprep.subr.mxu0 0.0
  %348 = vmatpush1.msra.mxu0 0.0
  %349 = vmatprep.subr.mxu0 0.0
  %350 = vmatpush1.msra.mxu0 0.0
  %351 = vmatprep.subr.mxu0 0.0
  %352 = vmatpush1.msra.mxu0 0.0
  %353 = vmatprep.subr.mxu0 0.0
  %354 = vmatpush1.msra.mxu0 0.0
  %355 = vmatprep.subr.mxu0 0.0
  %356 = vmatpush1.msra.mxu0 0.0
  %357 = vmatprep.subr.mxu0 0.0
  %358 = vmatpush1.msra.mxu0 0.0
  %359 = vmatprep.subr.mxu0 0.0
  %360 = vmatpush1.msra.mxu0 0.0
  %361 = vmatprep.subr.mxu0 0.0
  %362 = vmatpush1.msra.mxu0 0.0
  %363 = vmatprep.subr.mxu0 0.0
  %364 = vmatpush1.msra.mxu0 0.0
  %365 = vmatprep.subr.mxu0 0.0
  %366 = vmatpush1.msra.mxu0 0.0
  %367 = vmatprep.subr.mxu0 0.0
  %368 = vmatpush1.msra.mxu0 0.0
  %369 = vmatprep.subr.mxu0 0.0
  %370 = vmatpush1.msra.mxu0 0.0
  %371 = vmatprep.subr.mxu0 0.0
  %372 = vmatpush1.msra.mxu0 0.0
  %373 = vmatprep.subr.mxu0 0.0
  %374 = vmatpush1.msra.mxu0 0.0
  %375 = vmatprep.subr.mxu0 0.0
  %376 = vmatpush1.msra.mxu0 0.0
  %377 = vmatprep.subr.mxu0 0.0
  %378 = vmatpush1.msra.mxu0 0.0
  %379 = vmatprep.subr.mxu0 0.0
  %380 = vmatpush1.msra.mxu0 0.0
  %381 = vmatprep.subr.mxu0 0.0
  %382 = vmatpush1.msra.mxu0 0.0
  %383 = vmatprep.mubr.f32.mxu0 0.0
  %384 = vmatmul.mubr.f32.gmra.mrb[0].mxu0 %v317
  %v385 = vpop.f32.mrb[0].mxu0
  %v386 = vadd.f32 %v210, %v385
  %v387 = vpop.f32.mrb[0].mxu0
  %388 = vdwg.mxu0
  %v389 = vmul.f32 %v386, 0.5
  %v390 = vtanh.pop %v389
  %v391 = vmul.f32 %v390, 0.5
  %v392 = vadd.f32 %v391, 0.5
  %v393 = vtanh.pop %v386
  %v394 = vmul.f32 %v392, 0.0
  %396 = vrot.lane.b32.xlu0 %v393, 64
  %v397 = vpop.permute.xlu0 %396
  %v399 = vmul.f32 %v392, %v397
  %401 = vrot.lane.b32.xlu0 %v399, 32
  %v402 = vpop.permute.xlu0 %401
  %v404 = vadd.f32 %v394, %v402
  %v405 = vtanh.pop %v404
  %407 = vrot.lane.b32.xlu0 %v405, 64
  %v408 = vpop.permute.xlu0 %407
  %v410 = vmul.f32 %v392, %v408
  %v411 = vld [vmem:[#allocation2 + $0x8] sm:$0xff]
  %v412 = vsel %vm213, %v312, 0
  %414 = vmatprep.subr.mxu0 0.0
  %415 = vmatpush1.msra.mxu0 %v193
  %416 = vmatprep.subr.mxu0 0.0
  %417 = vmatpush1.msra.mxu0 %v194
  %418 = vmatprep.subr.mxu0 0.0
  %419 = vmatpush1.msra.mxu0 %v195
  %420 = vmatprep.subr.mxu0 0.0
  %421 = vmatpush1.msra.mxu0 %v196
  %422 = vmatprep.subr.mxu0 0.0
  %423 = vmatpush1.msra.mxu0 0.0
  %424 = vmatprep.subr.mxu0 0.0
  %425 = vmatpush1.msra.mxu0 0.0
  %426 = vmatprep.subr.mxu0 0.0
  %427 = vmatpush1.msra.mxu0 0.0
  %428 = vmatprep.subr.mxu0 0.0
  %429 = vmatpush1.msra.mxu0 0.0
  %430 = vmatprep.subr.mxu0 0.0
  %431 = vmatpush1.msra.mxu0 0.0
  %432 = vmatprep.subr.mxu0 0.0
  %433 = vmatpush1.msra.mxu0 0.0
  %434 = vmatprep.subr.mxu0 0.0
  %435 = vmatpush1.msra.mxu0 0.0
  %436 = vmatprep.subr.mxu0 0.0
  %437 = vmatpush1.msra.mxu0 0.0
  %438 = vmatprep.subr.mxu0 0.0
  %439 = vmatpush1.msra.mxu0 0.0
  %440 = vmatprep.subr.mxu0 0.0
  %441 = vmatpush1.msra.mxu0 0.0
  %442 = vmatprep.subr.mxu0 0.0
  %443 = vmatpush1.msra.mxu0 0.0
  %444 = vmatprep.subr.mxu0 0.0
  %445 = vmatpush1.msra.mxu0 0.0
  %446 = vmatprep.subr.mxu0 0.0
  %447 = vmatpush1.msra.mxu0 0.0
  %448 = vmatprep.subr.mxu0 0.0
  %449 = vmatpush1.msra.mxu0 0.0
  %450 = vmatprep.subr.mxu0 0.0
  %451 = vmatpush1.msra.mxu0 0.0
  %452 = vmatprep.subr.mxu0 0.0
  %453 = vmatpush1.msra.mxu0 0.0
  %454 = vmatprep.subr.mxu0 0.0
  %455 = vmatpush1.msra.mxu0 0.0
  %456 = vmatprep.subr.mxu0 0.0
  %457 = vmatpush1.msra.mxu0 0.0
  %458 = vmatprep.subr.mxu0 0.0
  %459 = vmatpush1.msra.mxu0 0.0
  %460 = vmatprep.subr.mxu0 0.0
  %461 = vmatpush1.msra.mxu0 0.0
  %462 = vmatprep.subr.mxu0 0.0
  %463 = vmatpush1.msra.mxu0 0.0
  %464 = vmatprep.subr.mxu0 0.0
  %465 = vmatpush1.msra.mxu0 0.0
  %466 = vmatprep.subr.mxu0 0.0
  %467 = vmatpush1.msra.mxu0 0.0
  %468 = vmatprep.subr.mxu0 0.0
  %469 = vmatpush1.msra.mxu0 0.0
  %470 = vmatprep.subr.mxu0 0.0
  %471 = vmatpush1.msra.mxu0 0.0
  %472 = vmatprep.subr.mxu0 0.0
  %473 = vmatpush1.msra.mxu0 0.0
  %474 = vmatprep.subr.mxu0 0.0
  %475 = vmatpush1.msra.mxu0 0.0
  %476 = vmatprep.subr.mxu0 0.0
  %477 = vmatpush1.msra.mxu0 0.0
  %478 = vmatprep.mubr.f32.mxu0 0.0
  %479 = vmatmul.mubr.f32.gmra.mrb[0].mxu0 %v412
  %v480 = vpop.f32.mrb[0].mxu0
  %v481 = vadd.f32 0.0, %v480
  %v482 = vpop.f32.mrb[0].mxu0
  %483 = vdwg.mxu0
  %v484 = vadd.f32 %v411, %v481
  %v485 = vmul.f32 %v484, 0.5
  %v486 = vtanh.pop %v485
  %v487 = vmul.f32 %v486, 0.5
  %v488 = vadd.f32 %v487, 0.5
  %v489 = vtanh.pop %v484
  %v490 = vmul.f32 %v488, %v303
  %492 = vrot.lane.b32.xlu0 %v489, 64
  %v493 = vpop.permute.xlu0 %492
  %v495 = vmul.f32 %v488, %v493
  %497 = vrot.lane.b32.xlu0 %v495, 32
  %v498 = vpop.permute.xlu0 %497
  %v500 = vadd.f32 %v490, %v498
  %v501 = vtanh.pop %v500
  %503 = vrot.lane.b32.xlu0 %v501, 64
  %v504 = vpop.permute.xlu0 %503
  %v506 = vmul.f32 %v488, %v504
  %508 = vrot.lane.b32.xlu0 %v506, 32
  %v509 = vpop.permute.xlu0 %508
  %512 = vrot.lane.b32.xlu0 %v410, 64
  %v513 = vpop.permute.xlu0 %512
  %v515 = vsel %vm213, %v509, %v513
  %v517 = vsel %vm315, %v515, 0
  %519 = vmatprep.subr.mxu0 0.0
  %520 = vmatpush1.msra.mxu0 %v197
  %521 = vmatprep.subr.mxu0 0.0
  %522 = vmatpush1.msra.mxu0 %v198
  %523 = vmatprep.subr.mxu0 0.0
  %524 = vmatpush1.msra.mxu0 %v199
  %525 = vmatprep.subr.mxu0 0.0
  %526 = vmatpush1.msra.mxu0 %v200
  %527 = vmatprep.subr.mxu0 0.0
  %528 = vmatpush1.msra.mxu0 %v201
  %529 = vmatprep.subr.mxu0 0.0
  %530 = vmatpush1.msra.mxu0 %v202
  %531 = vmatprep.subr.mxu0 0.0
  %532 = vmatpush1.msra.mxu0 %v203
  %533 = vmatprep.subr.mxu0 0.0
  %534 = vmatpush1.msra.mxu0 %v204
  %535 = vmatprep.subr.mxu0 0.0
  %536 = vmatpush1.msra.mxu0 0.0
  %537 = vmatprep.subr.mxu0 0.0
  %538 = vmatpush1.msra.mxu0 0.0
  %539 = vmatprep.subr.mxu0 0.0
  %540 = vmatpush1.msra.mxu0 0.0
  %541 = vmatprep.subr.mxu0 0.0
  %542 = vmatpush1.msra.mxu0 0.0
  %543 = vmatprep.subr.mxu0 0.0
  %544 = vmatpush1.msra.mxu0 0.0
  %545 = vmatprep.subr.mxu0 0.0
  %546 = vmatpush1.msra.mxu0 0.0
  %547 = vmatprep.subr.mxu0 0.0
  %548 = vmatpush1.msra.mxu0 0.0
  %549 = vmatprep.subr.mxu0 0.0
  %550 = vmatpush1.msra.mxu0 0.0
  %551 = vmatprep.subr.mxu0 0.0
  %552 = vmatpush1.msra.mxu0 0.0
  %553 = vmatprep.subr.mxu0 0.0
  %554 = vmatpush1.msra.mxu0 0.0
  %555 = vmatprep.subr.mxu0 0.0
  %556 = vmatpush1.msra.mxu0 0.0
  %557 = vmatprep.subr.mxu0 0.0
  %558 = vmatpush1.msra.mxu0 0.0
  %559 = vmatprep.subr.mxu0 0.0
  %560 = vmatpush1.msra.mxu0 0.0
  %561 = vmatprep.subr.mxu0 0.0
  %562 = vmatpush1.msra.mxu0 0.0
  %563 = vmatprep.subr.mxu0 0.0
  %564 = vmatpush1.msra.mxu0 0.0
  %565 = vmatprep.subr.mxu0 0.0
  %566 = vmatpush1.msra.mxu0 0.0
  %567 = vmatprep.subr.mxu0 0.0
  %568 = vmatpush1.msra.mxu0 0.0
  %569 = vmatprep.subr.mxu0 0.0
  %570 = vmatpush1.msra.mxu0 0.0
  %571 = vmatprep.subr.mxu0 0.0
  %572 = vmatpush1.msra.mxu0 0.0
  %573 = vmatprep.subr.mxu0 0.0
  %574 = vmatpush1.msra.mxu0 0.0
  %575 = vmatprep.subr.mxu0 0.0
  %576 = vmatpush1.msra.mxu0 0.0
  %577 = vmatprep.subr.mxu0 0.0
  %578 = vmatpush1.msra.mxu0 0.0
  %579 = vmatprep.subr.mxu0 0.0
  %580 = vmatpush1.msra.mxu0 0.0
  %581 = vmatprep.subr.mxu0 0.0
  %582 = vmatpush1.msra.mxu0 0.0
  %583 = vmatprep.mubr.f32.mxu0 0.0
  %584 = vmatmul.mubr.f32.gmra.mrb[0].mxu0 %v517
  %v585 = vpop.f32.mrb[0].mxu0
  %v586 = vadd.f32 %v210, %v585
  %v587 = vpop.f32.mrb[0].mxu0
  %588 = vdwg.mxu0
  %v589 = vmul.f32 %v586, 0.5
  %v590 = vtanh.pop %v589
  %v591 = vmul.f32 %v590, 0.5
  %v592 = vadd.f32 %v591, 0.5
  %v593 = vtanh.pop %v586
  %v594 = vmul.f32 %v592, %v404
  %596 = vrot.lane.b32.xlu0 %v593, 64
  %v597 = vpop.permute.xlu0 %596
  %v599 = vmul.f32 %v592, %v597
  %601 = vrot.lane.b32.xlu0 %v599, 32
  %v602 = vpop.permute.xlu0 %601
  %v604 = vadd.f32 %v594, %v602
  %v605 = vtanh.pop %v604
  %607 = vrot.lane.b32.xlu0 %v605, 64
  %v608 = vpop.permute.xlu0 %607
  %v610 = vmul.f32 %v592, %v608
  %v611 = vld [vmem:[#allocation2 + $0x10] sm:$0xff]
  %v612 = vsel %vm213, %v509, 0
  %614 = vmatprep.subr.mxu0 0.0
  %615 = vmatpush1.msra.mxu0 %v193
  %616 = vmatprep.subr.mxu0 0.0
  %617 = vmatpush1.msra.mxu0 %v194
  %618 = vmatprep.subr.mxu0 0.0
  %619 = vmatpush1.msra.mxu0 %v195
  %620 = vmatprep.subr.mxu0 0.0
  %621 = vmatpush1.msra.mxu0 %v196
  %622 = vmatprep.subr.mxu0 0.0
  %623 = vmatpush1.msra.mxu0 0.0
  %624 = vmatprep.subr.mxu0 0.0
  %625 = vmatpush1.msra.mxu0 0.0
  %626 = vmatprep.subr.mxu0 0.0
  %627 = vmatpush1.msra.mxu0 0.0
  %628 = vmatprep.subr.mxu0 0.0
  %629 = vmatpush1.msra.mxu0 0.0
  %630 = vmatprep.subr.mxu0 0.0
  %631 = vmatpush1.msra.mxu0 0.0
  %632 = vmatprep.subr.mxu0 0.0
  %633 = vmatpush1.msra.mxu0 0.0
  %634 = vmatprep.subr.mxu0 0.0
  %635 = vmatpush1.msra.mxu0 0.0
  %636 = vmatprep.subr.mxu0 0.0
  %637 = vmatpush1.msra.mxu0 0.0
  %638 = vmatprep.subr.mxu0 0.0
  %639 = vmatpush1.msra.mxu0 0.0
  %640 = vmatprep.subr.mxu0 0.0
  %641 = vmatpush1.msra.mxu0 0.0
  %642 = vmatprep.subr.mxu0 0.0
  %643 = vmatpush1.msra.mxu0 0.0
  %644 = vmatprep.subr.mxu0 0.0
  %645 = vmatpush1.msra.mxu0 0.0
  %646 = vmatprep.subr.mxu0 0.0
  %647 = vmatpush1.msra.mxu0 0.0
  %648 = vmatprep.subr.mxu0 0.0
  %649 = vmatpush1.msra.mxu0 0.0
  %650 = vmatprep.subr.mxu0 0.0
  %651 = vmatpush1.msra.mxu0 0.0
  %652 = vmatprep.subr.mxu0 0.0
  %653 = vmatpush1.msra.mxu0 0.0
  %654 = vmatprep.subr.mxu0 0.0
  %655 = vmatpush1.msra.mxu0 0.0
  %656 = vmatprep.subr.mxu0 0.0
  %657 = vmatpush1.msra.mxu0 0.0
  %658 = vmatprep.subr.mxu0 0.0
  %659 = vmatpush1.msra.mxu0 0.0
  %660 = vmatprep.subr.mxu0 0.0
  %661 = vmatpush1.msra.mxu0 0.0
  %662 = vmatprep.subr.mxu0 0.0
  %663 = vmatpush1.msra.mxu0 0.0
  %664 = vmatprep.subr.mxu0 0.0
  %665 = vmatpush1.msra.mxu0 0.0
  %666 = vmatprep.subr.mxu0 0.0
  %667 = vmatpush1.msra.mxu0 0.0
  %668 = vmatprep.subr.mxu0 0.0
  %669 = vmatpush1.msra.mxu0 0.0
  %670 = vmatprep.subr.mxu0 0.0
  %671 = vmatpush1.msra.mxu0 0.0
  %672 = vmatprep.subr.mxu0 0.0
  %673 = vmatpush1.msra.mxu0 0.0
  %674 = vmatprep.subr.mxu0 0.0
  %675 = vmatpush1.msra.mxu0 0.0
  %676 = vmatprep.subr.mxu0 0.0
  %677 = vmatpush1.msra.mxu0 0.0
  %678 = vmatprep.mubr.f32.mxu0 0.0
  %679 = vmatmul.mubr.f32.gmra.mrb[0].mxu0 %v612
  %v680 = vpop.f32.mrb[0].mxu0
  %v681 = vadd.f32 0.0, %v680
  %v682 = vpop.f32.mrb[0].mxu0
  %683 = vdwg.mxu0
  %v684 = vadd.f32 %v611, %v681
  %v685 = vmul.f32 %v684, 0.5
  %v686 = vtanh.pop %v685
  %v687 = vmul.f32 %v686, 0.5
  %v688 = vadd.f32 %v687, 0.5
  %v689 = vtanh.pop %v684
  %v690 = vmul.f32 %v688, %v500
  %692 = vrot.lane.b32.xlu0 %v689, 64
  %v693 = vpop.permute.xlu0 %692
  %v695 = vmul.f32 %v688, %v693
  %697 = vrot.lane.b32.xlu0 %v695, 32
  %v698 = vpop.permute.xlu0 %697
  %v700 = vadd.f32 %v690, %v698
  %v701 = vtanh.pop %v700
  %703 = vrot.lane.b32.xlu0 %v701, 64
  %v704 = vpop.permute.xlu0 %703
  %v706 = vmul.f32 %v688, %v704
  %708 = vrot.lane.b32.xlu0 %v706, 32
  %v709 = vpop.permute.xlu0 %708
  %712 = vrot.lane.b32.xlu0 %v610, 64
  %v713 = vpop.permute.xlu0 %712
  %v715 = vsel %vm213, %v709, %v713
  %v717 = vsel %vm315, %v715, 0
  %719 = vmatprep.subr.mxu0 0.0
  %720 = vmatpush1.msra.mxu0 %v197
  %721 = vmatprep.subr.mxu0 0.0
  %722 = vmatpush1.msra.mxu0 %v198
  %723 = vmatprep.subr.mxu0 0.0
  %724 = vmatpush1.msra.mxu0 %v199
  %725 = vmatprep.subr.mxu0 0.0
  %726 = vmatpush1.msra.mxu0 %v200
  %727 = vmatprep.subr.mxu0 0.0
  %728 = vmatpush1.msra.mxu0 %v201
  %729 = vmatprep.subr.mxu0 0.0
  %730 = vmatpush1.msra.mxu0 %v202
  %731 = vmatprep.subr.mxu0 0.0
  %732 = vmatpush1.msra.mxu0 %v203
  %733 = vmatprep.subr.mxu0 0.0
  %734 = vmatpush1.msra.mxu0 %v204
  %735 = vmatprep.subr.mxu0 0.0
  %736 = vmatpush1.msra.mxu0 0.0
  %737 = vmatprep.subr.mxu0 0.0
  %738 = vmatpush1.msra.mxu0 0.0
  %739 = vmatprep.subr.mxu0 0.0
  %740 = vmatpush1.msra.mxu0 0.0
  %741 = vmatprep.subr.mxu0 0.0
  %742 = vmatpush1.msra.mxu0 0.0
  %743 = vmatprep.subr.mxu0 0.0
  %744 = vmatpush1.msra.mxu0 0.0
  %745 = vmatprep.subr.mxu0 0.0
  %746 = vmatpush1.msra.mxu0 0.0
  %747 = vmatprep.subr.mxu0 0.0
  %748 = vmatpush1.msra.mxu0 0.0
  %749 = vmatprep.subr.mxu0 0.0
  %750 = vmatpush1.msra.mxu0 0.0
  %751 = vmatprep.subr.mxu0 0.0
  %752 = vmatpush1.msra.mxu0 0.0
  %753 = vmatprep.subr.mxu0 0.0
  %754 = vmatpush1.msra.mxu0 0.0
  %755 = vmatprep.subr.mxu0 0.0
  %756 = vmatpush1.msra.mxu0 0.0
  %757 = vmatprep.subr.mxu0 0.0
  %758 = vmatpush1.msra.mxu0 0.0
  %759 = vmatprep.subr.mxu0 0.0
  %760 = vmatpush1.msra.mxu0 0.0
  %761 = vmatprep.subr.mxu0 0.0
  %762 = vmatpush1.msra.mxu0 0.0
  %763 = vmatprep.subr.mxu0 0.0
  %764 = vmatpush1.msra.mxu0 0.0
  %765 = vmatprep.subr.mxu0 0.0
  %766 = vmatpush1.msra.mxu0 0.0
  %767 = vmatprep.subr.mxu0 0.0
  %768 = vmatpush1.msra.mxu0 0.0
  %769 = vmatprep.subr.mxu0 0.0
  %770 = vmatpush1.msra.mxu0 0.0
  %771 = vmatprep.subr.mxu0 0.0
  %772 = vmatpush1.msra.mxu0 0.0
  %773 = vmatprep.subr.mxu0 0.0
  %774 = vmatpush1.msra.mxu0 0.0
  %775 = vmatprep.subr.mxu0 0.0
  %776 = vmatpush1.msra.mxu0 0.0
  %777 = vmatprep.subr.mxu0 0.0
  %778 = vmatpush1.msra.mxu0 0.0
  %779 = vmatprep.subr.mxu0 0.0
  %780 = vmatpush1.msra.mxu0 0.0
  %781 = vmatprep.subr.mxu0 0.0
  %782 = vmatpush1.msra.mxu0 0.0
  %783 = vmatprep.mubr.f32.mxu0 0.0
  %784 = vmatmul.mubr.f32.gmra.mrb[0].mxu0 %v717
  %v785 = vpop.f32.mrb[0].mxu0
  %v786 = vadd.f32 %v210, %v785
  %v787 = vpop.f32.mrb[0].mxu0
  %788 = vdwg.mxu0
  %v789 = vmul.f32 %v786, 0.5
  %v790 = vtanh.pop %v789
  %v791 = vmul.f32 %v790, 0.5
  %v792 = vadd.f32 %v791, 0.5
  %v793 = vtanh.pop %v786
  %v794 = vmul.f32 %v792, %v604
  %796 = vrot.lane.b32.xlu0 %v793, 64
  %v797 = vpop.permute.xlu0 %796
  %v799 = vmul.f32 %v792, %v797
  %801 = vrot.lane.b32.xlu0 %v799, 32
  %v802 = vpop.permute.xlu0 %801
  %v804 = vadd.f32 %v794, %v802
  %v805 = vtanh.pop %v804
  %807 = vrot.lane.b32.xlu0 %v805, 64
  %v808 = vpop.permute.xlu0 %807
  %v810 = vmul.f32 %v792, %v808
  %v811 = vld [vmem:[#allocation2 + $0x18] sm:$0xff]
  %v812 = vsel %vm213, %v709, 0
  %814 = vmatprep.subr.mxu0 0.0
  %815 = vmatpush1.msra.mxu0 %v193
  %816 = vmatprep.subr.mxu0 0.0
  %817 = vmatpush1.msra.mxu0 %v194
  %818 = vmatprep.subr.mxu0 0.0
  %819 = vmatpush1.msra.mxu0 %v195
  %820 = vmatprep.subr.mxu0 0.0
  %821 = vmatpush1.msra.mxu0 %v196
  %822 = vmatprep.subr.mxu0 0.0
  %823 = vmatpush1.msra.mxu0 0.0
  %824 = vmatprep.subr.mxu0 0.0
  %825 = vmatpush1.msra.mxu0 0.0
  %826 = vmatprep.subr.mxu0 0.0
  %827 = vmatpush1.msra.mxu0 0.0
  %828 = vmatprep.subr.mxu0 0.0
  %829 = vmatpush1.msra.mxu0 0.0
  %830 = vmatprep.subr.mxu0 0.0
  %831 = vmatpush1.msra.mxu0 0.0
  %832 = vmatprep.subr.mxu0 0.0
  %833 = vmatpush1.msra.mxu0 0.0
  %834 = vmatprep.subr.mxu0 0.0
  %835 = vmatpush1.msra.mxu0 0.0
  %836 = vmatprep.subr.mxu0 0.0
  %837 = vmatpush1.msra.mxu0 0.0
  %838 = vmatprep.subr.mxu0 0.0
  %839 = vmatpush1.msra.mxu0 0.0
  %840 = vmatprep.subr.mxu0 0.0
  %841 = vmatpush1.msra.mxu0 0.0
  %842 = vmatprep.subr.mxu0 0.0
  %843 = vmatpush1.msra.mxu0 0.0
  %844 = vmatprep.subr.mxu0 0.0
  %845 = vmatpush1.msra.mxu0 0.0
  %846 = vmatprep.subr.mxu0 0.0
  %847 = vmatpush1.msra.mxu0 0.0
  %848 = vmatprep.subr.mxu0 0.0
  %849 = vmatpush1.msra.mxu0 0.0
  %850 = vmatprep.subr.mxu0 0.0
  %851 = vmatpush1.msra.mxu0 0.0
  %852 = vmatprep.subr.mxu0 0.0
  %853 = vmatpush1.msra.mxu0 0.0
  %854 = vmatprep.subr.mxu0 0.0
  %855 = vmatpush1.msra.mxu0 0.0
  %856 = vmatprep.subr.mxu0 0.0
  %857 = vmatpush1.msra.mxu0 0.0
  %858 = vmatprep.subr.mxu0 0.0
  %859 = vmatpush1.msra.mxu0 0.0
  %860 = vmatprep.subr.mxu0 0.0
  %861 = vmatpush1.msra.mxu0 0.0
  %862 = vmatprep.subr.mxu0 0.0
  %863 = vmatpush1.msra.mxu0 0.0
  %864 = vmatprep.subr.mxu0 0.0
  %865 = vmatpush1.msra.mxu0 0.0
  %866 = vmatprep.subr.mxu0 0.0
  %867 = vmatpush1.msra.mxu0 0.0
  %868 = vmatprep.subr.mxu0 0.0
  %869 = vmatpush1.msra.mxu0 0.0
  %870 = vmatprep.subr.mxu0 0.0
  %871 = vmatpush1.msra.mxu0 0.0
  %872 = vmatprep.subr.mxu0 0.0
  %873 = vmatpush1.msra.mxu0 0.0
  %874 = vmatprep.subr.mxu0 0.0
  %875 = vmatpush1.msra.mxu0 0.0
  %876 = vmatprep.subr.mxu0 0.0
  %877 = vmatpush1.msra.mxu0 0.0
  %878 = vmatprep.mubr.f32.mxu0 0.0
  %879 = vmatmul.mubr.f32.gmra.mrb[0].mxu0 %v812
  %v880 = vpop.f32.mrb[0].mxu0
  %v881 = vadd.f32 0.0, %v880
  %v882 = vpop.f32.mrb[0].mxu0
  %883 = vdwg.mxu0
  %v884 = vadd.f32 %v811, %v881
  %v885 = vmul.f32 %v884, 0.5
  %v886 = vtanh.pop %v885
  %v887 = vmul.f32 %v886, 0.5
  %v888 = vadd.f32 %v887, 0.5
  %v889 = vtanh.pop %v884
  %v890 = vmul.f32 %v888, %v700
  %892 = vrot.lane.b32.xlu0 %v889, 64
  %v893 = vpop.permute.xlu0 %892
  %v895 = vmul.f32 %v888, %v893
  %897 = vrot.lane.b32.xlu0 %v895, 32
  %v898 = vpop.permute.xlu0 %897
  %v900 = vadd.f32 %v890, %v898
  %v901 = vtanh.pop %v900
  %903 = vrot.lane.b32.xlu0 %v901, 64
  %v904 = vpop.permute.xlu0 %903
  %v906 = vmul.f32 %v888, %v904
  %908 = vrot.lane.b32.xlu0 %v906, 32
  %v909 = vpop.permute.xlu0 %908
  %912 = vrot.lane.b32.xlu0 %v810, 64
  %v913 = vpop.permute.xlu0 %912
  %v915 = vsel %vm213, %v909, %v913
  %v917 = vsel %vm315, %v915, 0
  %919 = vmatprep.subr.mxu0 0.0
  %920 = vmatpush1.msra.mxu0 %v197
  %921 = vmatprep.subr.mxu0 0.0
  %922 = vmatpush1.msra.mxu0 %v198
  %923 = vmatprep.subr.mxu0 0.0
  %924 = vmatpush1.msra.mxu0 %v199
  %925 = vmatprep.subr.mxu0 0.0
  %926 = vmatpush1.msra.mxu0 %v200
  %927 = vmatprep.subr.mxu0 0.0
  %928 = vmatpush1.msra.mxu0 %v201
  %929 = vmatprep.subr.mxu0 0.0
  %930 = vmatpush1.msra.mxu0 %v202
  %931 = vmatprep.subr.mxu0 0.0
  %932 = vmatpush1.msra.mxu0 %v203
  %933 = vmatprep.subr.mxu0 0.0
  %934 = vmatpush1.msra.mxu0 %v204
  %935 = vmatprep.subr.mxu0 0.0
  %936 = vmatpush1.msra.mxu0 0.0
  %937 = vmatprep.subr.mxu0 0.0
  %938 = vmatpush1.msra.mxu0 0.0
  %939 = vmatprep.subr.mxu0 0.0
  %940 = vmatpush1.msra.mxu0 0.0
  %941 = vmatprep.subr.mxu0 0.0
  %942 = vmatpush1.msra.mxu0 0.0
  %943 = vmatprep.subr.mxu0 0.0
  %944 = vmatpush1.msra.mxu0 0.0
  %945 = vmatprep.subr.mxu0 0.0
  %946 = vmatpush1.msra.mxu0 0.0
  %947 = vmatprep.subr.mxu0 0.0
  %948 = vmatpush1.msra.mxu0 0.0
  %949 = vmatprep.subr.mxu0 0.0
  %950 = vmatpush1.msra.mxu0 0.0
  %951 = vmatprep.subr.mxu0 0.0
  %952 = vmatpush1.msra.mxu0 0.0
  %953 = vmatprep.subr.mxu0 0.0
  %954 = vmatpush1.msra.mxu0 0.0
  %955 = vmatprep.subr.mxu0 0.0
  %956 = vmatpush1.msra.mxu0 0.0
  %957 = vmatprep.subr.mxu0 0.0
  %958 = vmatpush1.msra.mxu0 0.0
  %959 = vmatprep.subr.mxu0 0.0
  %960 = vmatpush1.msra.mxu0 0.0
  %961 = vmatprep.subr.mxu0 0.0
  %962 = vmatpush1.msra.mxu0 0.0
  %963 = vmatprep.subr.mxu0 0.0
  %964 = vmatpush1.msra.mxu0 0.0
  %965 = vmatprep.subr.mxu0 0.0
  %966 = vmatpush1.msra.mxu0 0.0
  %967 = vmatprep.subr.mxu0 0.0
  %968 = vmatpush1.msra.mxu0 0.0
  %969 = vmatprep.subr.mxu0 0.0
  %970 = vmatpush1.msra.mxu0 0.0
  %971 = vmatprep.subr.mxu0 0.0
  %972 = vmatpush1.msra.mxu0 0.0
  %973 = vmatprep.subr.mxu0 0.0
  %974 = vmatpush1.msra.mxu0 0.0
  %975 = vmatprep.subr.mxu0 0.0
  %976 = vmatpush1.msra.mxu0 0.0
  %977 = vmatprep.subr.mxu0 0.0
  %978 = vmatpush1.msra.mxu0 0.0
  %979 = vmatprep.subr.mxu0 0.0
  %980 = vmatpush1.msra.mxu0 0.0
  %981 = vmatprep.subr.mxu0 0.0
  %982 = vmatpush1.msra.mxu0 0.0
  %983 = vmatprep.mubr.f32.mxu0 0.0
  %984 = vmatmul.mubr.f32.gmra.mrb[0].mxu0 %v917
  %v985 = vpop.f32.mrb[0].mxu0
  %v986 = vadd.f32 %v210, %v985
  %v987 = vpop.f32.mrb[0].mxu0
  %988 = vdwg.mxu0
  %v989 = vmul.f32 %v986, 0.5
  %v990 = vtanh.pop %v989
  %v991 = vmul.f32 %v990, 0.5
  %v992 = vadd.f32 %v991, 0.5
  %v993 = vtanh.pop %v986
  %v994 = vmul.f32 %v992, %v804
  %996 = vrot.lane.b32.xlu0 %v993, 64
  %v997 = vpop.permute.xlu0 %996
  %v999 = vmul.f32 %v992, %v997
  %1001 = vrot.lane.b32.xlu0 %v999, 32
  %v1002 = vpop.permute.xlu0 %1001
  %v1004 = vadd.f32 %v994, %v1002
  %v1005 = vtanh.pop %v1004
  %1007 = vrot.lane.b32.xlu0 %v1005, 64
  %v1008 = vpop.permute.xlu0 %1007
  %v1010 = vmul.f32 %v992, %v1008
  %v1011 = vld [vmem:[#allocation2 + $0x20] sm:$0xff]
  %v1012 = vsel %vm213, %v909, 0
  %1014 = vmatprep.subr.mxu0 0.0
  %1015 = vmatpush1.msra.mxu0 %v193
  %1016 = vmatprep.subr.mxu0 0.0
  %1017 = vmatpush1.msra.mxu0 %v194
  %1018 = vmatprep.subr.mxu0 0.0
  %1019 = vmatpush1.msra.mxu0 %v195
  %1020 = vmatprep.subr.mxu0 0.0
  %1021 = vmatpush1.msra.mxu0 %v196
  %1022 = vmatprep.subr.mxu0 0.0
  %1023 = vmatpush1.msra.mxu0 0.0
  %1024 = vmatprep.subr.mxu0 0.0
  %1025 = vmatpush1.msra.mxu0 0.0
  %1026 = vmatprep.subr.mxu0 0.0
  %1027 = vmatpush1.msra.mxu0 0.0
  %1028 = vmatprep.subr.mxu0 0.0
  %1029 = vmatpush1.msra.mxu0 0.0
  %1030 = vmatprep.subr.mxu0 0.0
  %1031 = vmatpush1.msra.mxu0 0.0
  %1032 = vmatprep.subr.mxu0 0.0
  %1033 = vmatpush1.msra.mxu0 0.0
  %1034 = vmatprep.subr.mxu0 0.0
  %1035 = vmatpush1.msra.mxu0 0.0
  %1036 = vmatprep.subr.mxu0 0.0
  %1037 = vmatpush1.msra.mxu0 0.0
  %1038 = vmatprep.subr.mxu0 0.0
  %1039 = vmatpush1.msra.mxu0 0.0
  %1040 = vmatprep.subr.mxu0 0.0
  %1041 = vmatpush1.msra.mxu0 0.0
  %1042 = vmatprep.subr.mxu0 0.0
  %1043 = vmatpush1.msra.mxu0 0.0
  %1044 = vmatprep.subr.mxu0 0.0
  %1045 = vmatpush1.msra.mxu0 0.0
  %1046 = vmatprep.subr.mxu0 0.0
  %1047 = vmatpush1.msra.mxu0 0.0
  %1048 = vmatprep.subr.mxu0 0.0
  %1049 = vmatpush1.msra.mxu0 0.0
  %1050 = vmatprep.subr.mxu0 0.0
  %1051 = vmatpush1.msra.mxu0 0.0
  %1052 = vmatprep.subr.mxu0 0.0
  %1053 = vmatpush1.msra.mxu0 0.0
  %1054 = vmatprep.subr.mxu0 0.0
  %1055 = vmatpush1.msra.mxu0 0.0
  %1056 = vmatprep.subr.mxu0 0.0
  %1057 = vmatpush1.msra.mxu0 0.0
  %1058 = vmatprep.subr.mxu0 0.0
  %1059 = vmatpush1.msra.mxu0 0.0
  %1060 = vmatprep.subr.mxu0 0.0
  %1061 = vmatpush1.msra.mxu0 0.0
  %1062 = vmatprep.subr.mxu0 0.0
  %1063 = vmatpush1.msra.mxu0 0.0
  %1064 = vmatprep.subr.mxu0 0.0
  %1065 = vmatpush1.msra.mxu0 0.0
  %1066 = vmatprep.subr.mxu0 0.0
  %1067 = vmatpush1.msra.mxu0 0.0
  %1068 = vmatprep.subr.mxu0 0.0
  %1069 = vmatpush1.msra.mxu0 0.0
  %1070 = vmatprep.subr.mxu0 0.0
  %1071 = vmatpush1.msra.mxu0 0.0
  %1072 = vmatprep.subr.mxu0 0.0
  %1073 = vmatpush1.msra.mxu0 0.0
  %1074 = vmatprep.subr.mxu0 0.0
  %1075 = vmatpush1.msra.mxu0 0.0
  %1076 = vmatprep.subr.mxu0 0.0
  %1077 = vmatpush1.msra.mxu0 0.0
  %1078 = vmatprep.mubr.f32.mxu0 0.0
  %1079 = vmatmul.mubr.f32.gmra.mrb[0].mxu0 %v1012
  %v1080 = vpop.f32.mrb[0].mxu0
  %v1081 = vadd.f32 0.0, %v1080
  %v1082 = vpop.f32.mrb[0].mxu0
  %1083 = vdwg.mxu0
  %v1084 = vadd.f32 %v1011, %v1081
  %v1085 = vmul.f32 %v1084, 0.5
  %v1086 = vtanh.pop %v1085
  %v1087 = vmul.f32 %v1086, 0.5
  %v1088 = vadd.f32 %v1087, 0.5
  %v1089 = vtanh.pop %v1084
  %v1090 = vmul.f32 %v1088, %v900
  %1092 = vrot.lane.b32.xlu0 %v1089, 64
  %v1093 = vpop.permute.xlu0 %1092
  %v1095 = vmul.f32 %v1088, %v1093
  %1097 = vrot.lane.b32.xlu0 %v1095, 32
  %v1098 = vpop.permute.xlu0 %1097
  %v1100 = vadd.f32 %v1090, %v1098
  %v1101 = vtanh.pop %v1100
  %1103 = vrot.lane.b32.xlu0 %v1101, 64
  %v1104 = vpop.permute.xlu0 %1103
  %v1106 = vmul.f32 %v1088, %v1104
  %1108 = vrot.lane.b32.xlu0 %v1106, 32
  %v1109 = vpop.permute.xlu0 %1108
  %1112 = vrot.lane.b32.xlu0 %v1010, 64
  %v1113 = vpop.permute.xlu0 %1112
  %v1115 = vsel %vm213, %v1109, %v1113
  %v1117 = vsel %vm315, %v1115, 0
  %1119 = vmatprep.subr.mxu0 0.0
  %1120 = vmatpush1.msra.mxu0 %v197
  %1121 = vmatprep.subr.mxu0 0.0
  %1122 = vmatpush1.msra.mxu0 %v198
  %1123 = vmatprep.subr.mxu0 0.0
  %1124 = vmatpush1.msra.mxu0 %v199
  %1125 = vmatprep.subr.mxu0 0.0
  %1126 = vmatpush1.msra.mxu0 %v200
  %1127 = vmatprep.subr.mxu0 0.0
  %1128 = vmatpush1.msra.mxu0 %v201
  %1129 = vmatprep.subr.mxu0 0.0
  %1130 = vmatpush1.msra.mxu0 %v202
  %1131 = vmatprep.subr.mxu0 0.0
  %1132 = vmatpush1.msra.mxu0 %v203
  %1133 = vmatprep.subr.mxu0 0.0
  %1134 = vmatpush1.msra.mxu0 %v204
  %1135 = vmatprep.subr.mxu0 0.0
  %1136 = vmatpush1.msra.mxu0 0.0
  %1137 = vmatprep.subr.mxu0 0.0
  %1138 = vmatpush1.msra.mxu0 0.0
  %1139 = vmatprep.subr.mxu0 0.0
  %1140 = vmatpush1.msra.mxu0 0.0
  %1141 = vmatprep.subr.mxu0 0.0
  %1142 = vmatpush1.msra.mxu0 0.0
  %1143 = vmatprep.subr.mxu0 0.0
  %1144 = vmatpush1.msra.mxu0 0.0
  %1145 = vmatprep.subr.mxu0 0.0
  %1146 = vmatpush1.msra.mxu0 0.0
  %1147 = vmatprep.subr.mxu0 0.0
  %1148 = vmatpush1.msra.mxu0 0.0
  %1149 = vmatprep.subr.mxu0 0.0
  %1150 = vmatpush1.msra.mxu0 0.0
  %1151 = vmatprep.subr.mxu0 0.0
  %1152 = vmatpush1.msra.mxu0 0.0
  %1153 = vmatprep.subr.mxu0 0.0
  %1154 = vmatpush1.msra.mxu0 0.0
  %1155 = vmatprep.subr.mxu0 0.0
  %1156 = vmatpush1.msra.mxu0 0.0
  %1157 = vmatprep.subr.mxu0 0.0
  %1158 = vmatpush1.msra.mxu0 0.0
  %1159 = vmatprep.subr.mxu0 0.0
  %1160 = vmatpush1.msra.mxu0 0.0
  %1161 = vmatprep.subr.mxu0 0.0
  %1162 = vmatpush1.msra.mxu0 0.0
  %1163 = vmatprep.subr.mxu0 0.0
  %1164 = vmatpush1.msra.mxu0 0.0
  %1165 = vmatprep.subr.mxu0 0.0
  %1166 = vmatpush1.msra.mxu0 0.0
  %1167 = vmatprep.subr.mxu0 0.0
  %1168 = vmatpush1.msra.mxu0 0.0
  %1169 = vmatprep.subr.mxu0 0.0
  %1170 = vmatpush1.msra.mxu0 0.0
  %1171 = vmatprep.subr.mxu0 0.0
  %1172 = vmatpush1.msra.mxu0 0.0
  %1173 = vmatprep.subr.mxu0 0.0
  %1174 = vmatpush1.msra.mxu0 0.0
  %1175 = vmatprep.subr.mxu0 0.0
  %1176 = vmatpush1.msra.mxu0 0.0
  %1177 = vmatprep.subr.mxu0 0.0
  %1178 = vmatpush1.msra.mxu0 0.0
  %1179 = vmatprep.subr.mxu0 0.0
  %1180 = vmatpush1.msra.mxu0 0.0
  %1181 = vmatprep.subr.mxu0 0.0
  %1182 = vmatpush1.msra.mxu0 0.0
  %1183 = vmatprep.mubr.f32.mxu0 0.0
  %1184 = vmatmul.mubr.f32.gmra.mrb[0].mxu0 %v1117
  %v1185 = vpop.f32.mrb[0].mxu0
  %v1186 = vadd.f32 %v210, %v1185
  %v1187 = vpop.f32.mrb[0].mxu0
  %1188 = vdwg.mxu0
  %v1189 = vmul.f32 %v1186, 0.5
  %v1190 = vtanh.pop %v1189
  %v1191 = vmul.f32 %v1190, 0.5
  %v1192 = vadd.f32 %v1191, 0.5
  %v1193 = vtanh.pop %v1186
  %v1194 = vmul.f32 %v1192, %v1004
  %1196 = vrot.lane.b32.xlu0 %v1193, 64
  %v1197 = vpop.permute.xlu0 %1196
  %v1199 = vmul.f32 %v1192, %v1197
  %1201 = vrot.lane.b32.xlu0 %v1199, 32
  %v1202 = vpop.permute.xlu0 %1201
  %v1204 = vadd.f32 %v1194, %v1202
  %v1205 = vtanh.pop %v1204
  %1207 = vrot.lane.b32.xlu0 %v1205, 64
  %v1208 = vpop.permute.xlu0 %1207
  %v1210 = vmul.f32 %v1192, %v1208
  %v1211 = vld [vmem:[#allocation2 + $0x28] sm:$0xff]
  %v1212 = vsel %vm213, %v1109, 0
  %1214 = vmatprep.subr.mxu0 0.0
  %1215 = vmatpush1.msra.mxu0 %v193
  %1216 = vmatprep.subr.mxu0 0.0
  %1217 = vmatpush1.msra.mxu0 %v194
  %1218 = vmatprep.subr.mxu0 0.0
  %1219 = vmatpush1.msra.mxu0 %v195
  %1220 = vmatprep.subr.mxu0 0.0
  %1221 = vmatpush1.msra.mxu0 %v196
  %1222 = vmatprep.subr.mxu0 0.0
  %1223 = vmatpush1.msra.mxu0 0.0
  %1224 = vmatprep.subr.mxu0 0.0
  %1225 = vmatpush1.msra.mxu0 0.0
  %1226 = vmatprep.subr.mxu0 0.0
  %1227 = vmatpush1.msra.mxu0 0.0
  %1228 = vmatprep.subr.mxu0 0.0
  %1229 = vmatpush1.msra.mxu0 0.0
  %1230 = vmatprep.subr.mxu0 0.0
  %1231 = vmatpush1.msra.mxu0 0.0
  %1232 = vmatprep.subr.mxu0 0.0
  %1233 = vmatpush1.msra.mxu0 0.0
  %1234 = vmatprep.subr.mxu0 0.0
  %1235 = vmatpush1.msra.mxu0 0.0
  %1236 = vmatprep.subr.mxu0 0.0
  %1237 = vmatpush1.msra.mxu0 0.0
  %1238 = vmatprep.subr.mxu0 0.0
  %1239 = vmatpush1.msra.mxu0 0.0
  %1240 = vmatprep.subr.mxu0 0.0
  %1241 = vmatpush1.msra.mxu0 0.0
  %1242 = vmatprep.subr.mxu0 0.0
  %1243 = vmatpush1.msra.mxu0 0.0
  %1244 = vmatprep.subr.mxu0 0.0
  %1245 = vmatpush1.msra.mxu0 0.0
  %1246 = vmatprep.subr.mxu0 0.0
  %1247 = vmatpush1.msra.mxu0 0.0
  %1248 = vmatprep.subr.mxu0 0.0
  %1249 = vmatpush1.msra.mxu0 0.0
  %1250 = vmatprep.subr.mxu0 0.0
  %1251 = vmatpush1.msra.mxu0 0.0
  %1252 = vmatprep.subr.mxu0 0.0
  %1253 = vmatpush1.msra.mxu0 0.0
  %1254 = vmatprep.subr.mxu0 0.0
  %1255 = vmatpush1.msra.mxu0 0.0
  %1256 = vmatprep.subr.mxu0 0.0
  %1257 = vmatpush1.msra.mxu0 0.0
  %1258 = vmatprep.subr.mxu0 0.0
  %1259 = vmatpush1.msra.mxu0 0.0
  %1260 = vmatprep.subr.mxu0 0.0
  %1261 = vmatpush1.msra.mxu0 0.0
  %1262 = vmatprep.subr.mxu0 0.0
  %1263 = vmatpush1.msra.mxu0 0.0
  %1264 = vmatprep.subr.mxu0 0.0
  %1265 = vmatpush1.msra.mxu0 0.0
  %1266 = vmatprep.subr.mxu0 0.0
  %1267 = vmatpush1.msra.mxu0 0.0
  %1268 = vmatprep.subr.mxu0 0.0
  %1269 = vmatpush1.msra.mxu0 0.0
  %1270 = vmatprep.subr.mxu0 0.0
  %1271 = vmatpush1.msra.mxu0 0.0
  %1272 = vmatprep.subr.mxu0 0.0
  %1273 = vmatpush1.msra.mxu0 0.0
  %1274 = vmatprep.subr.mxu0 0.0
  %1275 = vmatpush1.msra.mxu0 0.0
  %1276 = vmatprep.subr.mxu0 0.0
  %1277 = vmatpush1.msra.mxu0 0.0
  %1278 = vmatprep.mubr.f32.mxu0 0.0
  %1279 = vmatmul.mubr.f32.gmra.mrb[0].mxu0 %v1212
  %v1280 = vpop.f32.mrb[0].mxu0
  %v1281 = vadd.f32 0.0, %v1280
  %v1282 = vpop.f32.mrb[0].mxu0
  %1283 = vdwg.mxu0
  %v1284 = vadd.f32 %v1211, %v1281
  %v1285 = vmul.f32 %v1284, 0.5
  %v1286 = vtanh.pop %v1285
  %v1287 = vmul.f32 %v1286, 0.5
  %v1288 = vadd.f32 %v1287, 0.5
  %v1289 = vtanh.pop %v1284
  %v1290 = vmul.f32 %v1288, %v1100
  %1292 = vrot.lane.b32.xlu0 %v1289, 64
  %v1293 = vpop.permute.xlu0 %1292
  %v1295 = vmul.f32 %v1288, %v1293
  %1297 = vrot.lane.b32.xlu0 %v1295, 32
  %v1298 = vpop.permute.xlu0 %1297
  %v1300 = vadd.f32 %v1290, %v1298
  %v1301 = vtanh.pop %v1300
  %1303 = vrot.lane.b32.xlu0 %v1301, 64
  %v1304 = vpop.permute.xlu0 %1303
  %v1306 = vmul.f32 %v1288, %v1304
  %1308 = vrot.lane.b32.xlu0 %v1306, 32
  %v1309 = vpop.permute.xlu0 %1308
  %1312 = vrot.lane.b32.xlu0 %v1210, 64
  %v1313 = vpop.permute.xlu0 %1312
  %v1315 = vsel %vm213, %v1309, %v1313
  %v1317 = vsel %vm315, %v1315, 0
  %1319 = vmatprep.subr.mxu0 0.0
  %1320 = vmatpush1.msra.mxu0 %v197
  %1321 = vmatprep.subr.mxu0 0.0
  %1322 = vmatpush1.msra.mxu0 %v198
  %1323 = vmatprep.subr.mxu0 0.0
  %1324 = vmatpush1.msra.mxu0 %v199
  %1325 = vmatprep.subr.mxu0 0.0
  %1326 = vmatpush1.msra.mxu0 %v200
  %1327 = vmatprep.subr.mxu0 0.0
  %1328 = vmatpush1.msra.mxu0 %v201
  %1329 = vmatprep.subr.mxu0 0.0
  %1330 = vmatpush1.msra.mxu0 %v202
  %1331 = vmatprep.subr.mxu0 0.0
  %1332 = vmatpush1.msra.mxu0 %v203
  %1333 = vmatprep.subr.mxu0 0.0
  %1334 = vmatpush1.msra.mxu0 %v204
  %1335 = vmatprep.subr.mxu0 0.0
  %1336 = vmatpush1.msra.mxu0 0.0
  %1337 = vmatprep.subr.mxu0 0.0
  %1338 = vmatpush1.msra.mxu0 0.0
  %1339 = vmatprep.subr.mxu0 0.0
  %1340 = vmatpush1.msra.mxu0 0.0
  %1341 = vmatprep.subr.mxu0 0.0
  %1342 = vmatpush1.msra.mxu0 0.0
  %1343 = vmatprep.subr.mxu0 0.0
  %1344 = vmatpush1.msra.mxu0 0.0
  %1345 = vmatprep.subr.mxu0 0.0
  %1346 = vmatpush1.msra.mxu0 0.0
  %1347 = vmatprep.subr.mxu0 0.0
  %1348 = vmatpush1.msra.mxu0 0.0
  %1349 = vmatprep.subr.mxu0 0.0
  %1350 = vmatpush1.msra.mxu0 0.0
  %1351 = vmatprep.subr.mxu0 0.0
  %1352 = vmatpush1.msra.mxu0 0.0
  %1353 = vmatprep.subr.mxu0 0.0
  %1354 = vmatpush1.msra.mxu0 0.0
  %1355 = vmatprep.subr.mxu0 0.0
  %1356 = vmatpush1.msra.mxu0 0.0
  %1357 = vmatprep.subr.mxu0 0.0
  %1358 = vmatpush1.msra.mxu0 0.0
  %1359 = vmatprep.subr.mxu0 0.0
  %1360 = vmatpush1.msra.mxu0 0.0
  %1361 = vmatprep.subr.mxu0 0.0
  %1362 = vmatpush1.msra.mxu0 0.0
  %1363 = vmatprep.subr.mxu0 0.0
  %1364 = vmatpush1.msra.mxu0 0.0
  %1365 = vmatprep.subr.mxu0 0.0
  %1366 = vmatpush1.msra.mxu0 0.0
  %1367 = vmatprep.subr.mxu0 0.0
  %1368 = vmatpush1.msra.mxu0 0.0
  %1369 = vmatprep.subr.mxu0 0.0
  %1370 = vmatpush1.msra.mxu0 0.0
  %1371 = vmatprep.subr.mxu0 0.0
  %1372 = vmatpush1.msra.mxu0 0.0
  %1373 = vmatprep.subr.mxu0 0.0
  %1374 = vmatpush1.msra.mxu0 0.0
  %1375 = vmatprep.subr.mxu0 0.0
  %1376 = vmatpush1.msra.mxu0 0.0
  %1377 = vmatprep.subr.mxu0 0.0
  %1378 = vmatpush1.msra.mxu0 0.0
  %1379 = vmatprep.subr.mxu0 0.0
  %1380 = vmatpush1.msra.mxu0 0.0
  %1381 = vmatprep.subr.mxu0 0.0
  %1382 = vmatpush1.msra.mxu0 0.0
  %1383 = vmatprep.mubr.f32.mxu0 0.0
  %1384 = vmatmul.mubr.f32.gmra.mrb[0].mxu0 %v1317
  %v1385 = vpop.f32.mrb[0].mxu0
  %v1386 = vadd.f32 %v210, %v1385
  %v1387 = vpop.f32.mrb[0].mxu0
  %1388 = vdwg.mxu0
  %v1389 = vmul.f32 %v1386, 0.5
  %v1390 = vtanh.pop %v1389
  %v1391 = vmul.f32 %v1390, 0.5
  %v1392 = vadd.f32 %v1391, 0.5
  %v1393 = vtanh.pop %v1386
  %v1394 = vmul.f32 %v1392, %v1204
  %1396 = vrot.lane.b32.xlu0 %v1393, 64
  %v1397 = vpop.permute.xlu0 %1396
  %v1399 = vmul.f32 %v1392, %v1397
  %1401 = vrot.lane.b32.xlu0 %v1399, 32
  %v1402 = vpop.permute.xlu0 %1401
  %v1404 = vadd.f32 %v1394, %v1402
  %v1405 = vtanh.pop %v1404
  %1407 = vrot.lane.b32.xlu0 %v1405, 64
  %v1408 = vpop.permute.xlu0 %1407
  %v1410 = vmul.f32 %v1392, %v1408
  %v1411 = vld [vmem:[#allocation2 + $0x30] sm:$0xff]
  %v1412 = vsel %vm213, %v1309, 0
  %1414 = vmatprep.subr.mxu0 0.0
  %1415 = vmatpush1.msra.mxu0 %v193
  %1416 = vmatprep.subr.mxu0 0.0
  %1417 = vmatpush1.msra.mxu0 %v194
  %1418 = vmatprep.subr.mxu0 0.0
  %1419 = vmatpush1.msra.mxu0 %v195
  %1420 = vmatprep.subr.mxu0 0.0
  %1421 = vmatpush1.msra.mxu0 %v196
  %1422 = vmatprep.subr.mxu0 0.0
  %1423 = vmatpush1.msra.mxu0 0.0
  %1424 = vmatprep.subr.mxu0 0.0
  %1425 = vmatpush1.msra.mxu0 0.0
  %1426 = vmatprep.subr.mxu0 0.0
  %1427 = vmatpush1.msra.mxu0 0.0
  %1428 = vmatprep.subr.mxu0 0.0
  %1429 = vmatpush1.msra.mxu0 0.0
  %1430 = vmatprep.subr.mxu0 0.0
  %1431 = vmatpush1.msra.mxu0 0.0
  %1432 = vmatprep.subr.mxu0 0.0
  %1433 = vmatpush1.msra.mxu0 0.0
  %1434 = vmatprep.subr.mxu0 0.0
  %1435 = vmatpush1.msra.mxu0 0.0
  %1436 = vmatprep.subr.mxu0 0.0
  %1437 = vmatpush1.msra.mxu0 0.0
  %1438 = vmatprep.subr.mxu0 0.0
  %1439 = vmatpush1.msra.mxu0 0.0
  %1440 = vmatprep.subr.mxu0 0.0
  %1441 = vmatpush1.msra.mxu0 0.0
  %1442 = vmatprep.subr.mxu0 0.0
  %1443 = vmatpush1.msra.mxu0 0.0
  %1444 = vmatprep.subr.mxu0 0.0
  %1445 = vmatpush1.msra.mxu0 0.0
  %1446 = vmatprep.subr.mxu0 0.0
  %1447 = vmatpush1.msra.mxu0 0.0
  %1448 = vmatprep.subr.mxu0 0.0
  %1449 = vmatpush1.msra.mxu0 0.0
  %1450 = vmatprep.subr.mxu0 0.0
  %1451 = vmatpush1.msra.mxu0 0.0
  %1452 = vmatprep.subr.mxu0 0.0
  %1453 = vmatpush1.msra.mxu0 0.0
  %1454 = vmatprep.subr.mxu0 0.0
  %1455 = vmatpush1.msra.mxu0 0.0
  %1456 = vmatprep.subr.mxu0 0.0
  %1457 = vmatpush1.msra.mxu0 0.0
  %1458 = vmatprep.subr.mxu0 0.0
  %1459 = vmatpush1.msra.mxu0 0.0
  %1460 = vmatprep.subr.mxu0 0.0
  %1461 = vmatpush1.msra.mxu0 0.0
  %1462 = vmatprep.subr.mxu0 0.0
  %1463 = vmatpush1.msra.mxu0 0.0
  %1464 = vmatprep.subr.mxu0 0.0
  %1465 = vmatpush1.msra.mxu0 0.0
  %1466 = vmatprep.subr.mxu0 0.0
  %1467 = vmatpush1.msra.mxu0 0.0
  %1468 = vmatprep.subr.mxu0 0.0
  %1469 = vmatpush1.msra.mxu0 0.0
  %1470 = vmatprep.subr.mxu0 0.0
  %1471 = vmatpush1.msra.mxu0 0.0
  %1472 = vmatprep.subr.mxu0 0.0
  %1473 = vmatpush1.msra.mxu0 0.0
  %1474 = vmatprep.subr.mxu0 0.0
  %1475 = vmatpush1.msra.mxu0 0.0
  %1476 = vmatprep.subr.mxu0 0.0
  %1477 = vmatpush1.msra.mxu0 0.0
  %1478 = vmatprep.mubr.f32.mxu0 0.0
  %1479 = vmatmul.mubr.f32.gmra.mrb[0].mxu0 %v1412
  %v1480 = vpop.f32.mrb[0].mxu0
  %v1481 = vadd.f32 0.0, %v1480
  %v1482 = vpop.f32.mrb[0].mxu0
  %1483 = vdwg.mxu0
  %v1484 = vadd.f32 %v1411, %v1481
  %v1485 = vmul.f32 %v1484, 0.5
  %v1486 = vtanh.pop %v1485
  %v1487 = vmul.f32 %v1486, 0.5
  %v1488 = vadd.f32 %v1487, 0.5
  %v1489 = vtanh.pop %v1484
  %v1490 = vmul.f32 %v1488, %v1300
  %1492 = vrot.lane.b32.xlu0 %v1489, 64
  %v1493 = vpop.permute.xlu0 %1492
  %v1495 = vmul.f32 %v1488, %v1493
  %1497 = vrot.lane.b32.xlu0 %v1495, 32
  %v1498 = vpop.permute.xlu0 %1497
  %v1500 = vadd.f32 %v1490, %v1498
  %v1501 = vtanh.pop %v1500
  %1503 = vrot.lane.b32.xlu0 %v1501, 64
  %v1504 = vpop.permute.xlu0 %1503
  %v1506 = vmul.f32 %v1488, %v1504
  %1508 = vrot.lane.b32.xlu0 %v1506, 32
  %v1509 = vpop.permute.xlu0 %1508
  %1512 = vrot.lane.b32.xlu0 %v1410, 64
  %v1513 = vpop.permute.xlu0 %1512
  %v1515 = vsel %vm213, %v1509, %v1513
  %v1517 = vsel %vm315, %v1515, 0
  %1519 = vmatprep.subr.mxu0 0.0
  %1520 = vmatpush1.msra.mxu0 %v197
  %1521 = vmatprep.subr.mxu0 0.0
  %1522 = vmatpush1.msra.mxu0 %v198
  %1523 = vmatprep.subr.mxu0 0.0
  %1524 = vmatpush1.msra.mxu0 %v199
  %1525 = vmatprep.subr.mxu0 0.0
  %1526 = vmatpush1.msra.mxu0 %v200
  %1527 = vmatprep.subr.mxu0 0.0
  %1528 = vmatpush1.msra.mxu0 %v201
  %1529 = vmatprep.subr.mxu0 0.0
  %1530 = vmatpush1.msra.mxu0 %v202
  %1531 = vmatprep.subr.mxu0 0.0
  %1532 = vmatpush1.msra.mxu0 %v203
  %1533 = vmatprep.subr.mxu0 0.0
  %1534 = vmatpush1.msra.mxu0 %v204
  %1535 = vmatprep.subr.mxu0 0.0
  %1536 = vmatpush1.msra.mxu0 0.0
  %1537 = vmatprep.subr.mxu0 0.0
  %1538 = vmatpush1.msra.mxu0 0.0
  %1539 = vmatprep.subr.mxu0 0.0
  %1540 = vmatpush1.msra.mxu0 0.0
  %1541 = vmatprep.subr.mxu0 0.0
  %1542 = vmatpush1.msra.mxu0 0.0
  %1543 = vmatprep.subr.mxu0 0.0
  %1544 = vmatpush1.msra.mxu0 0.0
  %1545 = vmatprep.subr.mxu0 0.0
  %1546 = vmatpush1.msra.mxu0 0.0
  %1547 = vmatprep.subr.mxu0 0.0
  %1548 = vmatpush1.msra.mxu0 0.0
  %1549 = vmatprep.subr.mxu0 0.0
  %1550 = vmatpush1.msra.mxu0 0.0
  %1551 = vmatprep.subr.mxu0 0.0
  %1552 = vmatpush1.msra.mxu0 0.0
  %1553 = vmatprep.subr.mxu0 0.0
  %1554 = vmatpush1.msra.mxu0 0.0
  %1555 = vmatprep.subr.mxu0 0.0
  %1556 = vmatpush1.msra.mxu0 0.0
  %1557 = vmatprep.subr.mxu0 0.0
  %1558 = vmatpush1.msra.mxu0 0.0
  %1559 = vmatprep.subr.mxu0 0.0
  %1560 = vmatpush1.msra.mxu0 0.0
  %1561 = vmatprep.subr.mxu0 0.0
  %1562 = vmatpush1.msra.mxu0 0.0
  %1563 = vmatprep.subr.mxu0 0.0
  %1564 = vmatpush1.msra.mxu0 0.0
  %1565 = vmatprep.subr.mxu0 0.0
  %1566 = vmatpush1.msra.mxu0 0.0
  %1567 = vmatprep.subr.mxu0 0.0
  %1568 = vmatpush1.msra.mxu0 0.0
  %1569 = vmatprep.subr.mxu0 0.0
  %1570 = vmatpush1.msra.mxu0 0.0
  %1571 = vmatprep.subr.mxu0 0.0
  %1572 = vmatpush1.msra.mxu0 0.0
  %1573 = vmatprep.subr.mxu0 0.0
  %1574 = vmatpush1.msra.mxu0 0.0
  %1575 = vmatprep.subr.mxu0 0.0
  %1576 = vmatpush1.msra.mxu0 0.0
  %1577 = vmatprep.subr.mxu0 0.0
  %1578 = vmatpush1.msra.mxu0 0.0
  %1579 = vmatprep.subr.mxu0 0.0
  %1580 = vmatpush1.msra.mxu0 0.0
  %1581 = vmatprep.subr.mxu0 0.0
  %1582 = vmatpush1.msra.mxu0 0.0
  %1583 = vmatprep.mubr.f32.mxu0 0.0
  %1584 = vmatmul.mubr.f32.gmra.mrb[0].mxu0 %v1517
  %v1585 = vpop.f32.mrb[0].mxu0
  %v1586 = vadd.f32 %v210, %v1585
  %v1587 = vpop.f32.mrb[0].mxu0
  %1588 = vdwg.mxu0
  %v1589 = vmul.f32 %v1586, 0.5
  %v1590 = vtanh.pop %v1589
  %v1591 = vmul.f32 %v1590, 0.5
  %v1592 = vadd.f32 %v1591, 0.5
  %v1593 = vtanh.pop %v1586
  %v1594 = vmul.f32 %v1592, %v1404
  %1596 = vrot.lane.b32.xlu0 %v1593, 64
  %v1597 = vpop.permute.xlu0 %1596
  %v1599 = vmul.f32 %v1592, %v1597
  %1601 = vrot.lane.b32.xlu0 %v1599, 32
  %v1602 = vpop.permute.xlu0 %1601
  %v1604 = vadd.f32 %v1594, %v1602
  %v1605 = vtanh.pop %v1604
  %1607 = vrot.lane.b32.xlu0 %v1605, 64
  %v1608 = vpop.permute.xlu0 %1607
  %v1610 = vmul.f32 %v1592, %v1608
  %v1611 = vld [vmem:[#allocation2 + $0x38] sm:$0xff]
  %v1612 = vsel %vm213, %v1509, 0
  %1614 = vmatprep.subr.mxu0 0.0
  %1615 = vmatpush1.msra.mxu0 %v193
  %1616 = vmatprep.subr.mxu0 0.0
  %1617 = vmatpush1.msra.mxu0 %v194
  %1618 = vmatprep.subr.mxu0 0.0
  %1619 = vmatpush1.msra.mxu0 %v195
  %1620 = vmatprep.subr.mxu0 0.0
  %1621 = vmatpush1.msra.mxu0 %v196
  %1622 = vmatprep.subr.mxu0 0.0
  %1623 = vmatpush1.msra.mxu0 0.0
  %1624 = vmatprep.subr.mxu0 0.0
  %1625 = vmatpush1.msra.mxu0 0.0
  %1626 = vmatprep.subr.mxu0 0.0
  %1627 = vmatpush1.msra.mxu0 0.0
  %1628 = vmatprep.subr.mxu0 0.0
  %1629 = vmatpush1.msra.mxu0 0.0
  %1630 = vmatprep.subr.mxu0 0.0
  %1631 = vmatpush1.msra.mxu0 0.0
  %1632 = vmatprep.subr.mxu0 0.0
  %1633 = vmatpush1.msra.mxu0 0.0
  %1634 = vmatprep.subr.mxu0 0.0
  %1635 = vmatpush1.msra.mxu0 0.0
  %1636 = vmatprep.subr.mxu0 0.0
  %1637 = vmatpush1.msra.mxu0 0.0
  %1638 = vmatprep.subr.mxu0 0.0
  %1639 = vmatpush1.msra.mxu0 0.0
  %1640 = vmatprep.subr.mxu0 0.0
  %1641 = vmatpush1.msra.mxu0 0.0
  %1642 = vmatprep.subr.mxu0 0.0
  %1643 = vmatpush1.msra.mxu0 0.0
  %1644 = vmatprep.subr.mxu0 0.0
  %1645 = vmatpush1.msra.mxu0 0.0
  %1646 = vmatprep.subr.mxu0 0.0
  %1647 = vmatpush1.msra.mxu0 0.0
  %1648 = vmatprep.subr.mxu0 0.0
  %1649 = vmatpush1.msra.mxu0 0.0
  %1650 = vmatprep.subr.mxu0 0.0
  %1651 = vmatpush1.msra.mxu0 0.0
  %1652 = vmatprep.subr.mxu0 0.0
  %1653 = vmatpush1.msra.mxu0 0.0
  %1654 = vmatprep.subr.mxu0 0.0
  %1655 = vmatpush1.msra.mxu0 0.0
  %1656 = vmatprep.subr.mxu0 0.0
  %1657 = vmatpush1.msra.mxu0 0.0
  %1658 = vmatprep.subr.mxu0 0.0
  %1659 = vmatpush1.msra.mxu0 0.0
  %1660 = vmatprep.subr.mxu0 0.0
  %1661 = vmatpush1.msra.mxu0 0.0
  %1662 = vmatprep.subr.mxu0 0.0
  %1663 = vmatpush1.msra.mxu0 0.0
  %1664 = vmatprep.subr.mxu0 0.0
  %1665 = vmatpush1.msra.mxu0 0.0
  %1666 = vmatprep.subr.mxu0 0.0
  %1667 = vmatpush1.msra.mxu0 0.0
  %1668 = vmatprep.subr.mxu0 0.0
  %1669 = vmatpush1.msra.mxu0 0.0
  %1670 = vmatprep.subr.mxu0 0.0
  %1671 = vmatpush1.msra.mxu0 0.0
  %1672 = vmatprep.subr.mxu0 0.0
  %1673 = vmatpush1.msra.mxu0 0.0
  %1674 = vmatprep.subr.mxu0 0.0
  %1675 = vmatpush1.msra.mxu0 0.0
  %1676 = vmatprep.subr.mxu0 0.0
  %1677 = vmatpush1.msra.mxu0 0.0
  %1678 = vmatprep.mubr.f32.mxu0 0.0
  %1679 = vmatmul.mubr.f32.gmra.mrb[0].mxu0 %v1612
  %v1680 = vpop.f32.mrb[0].mxu0
  %v1681 = vadd.f32 0.0, %v1680
  %v1682 = vpop.f32.mrb[0].mxu0
  %1683 = vdwg.mxu0
  %v1684 = vadd.f32 %v1611, %v1681
  %v1685 = vmul.f32 %v1684, 0.5
  %v1686 = vtanh.pop %v1685
  %v1687 = vmul.f32 %v1686, 0.5
  %v1688 = vadd.f32 %v1687, 0.5
  %v1689 = vtanh.pop %v1684
  %v1690 = vmul.f32 %v1688, %v1500
  %1692 = vrot.lane.b32.xlu0 %v1689, 64
  %v1693 = vpop.permute.xlu0 %1692
  %v1695 = vmul.f32 %v1688, %v1693
  %1697 = vrot.lane.b32.xlu0 %v1695, 32
  %v1698 = vpop.permute.xlu0 %1697
  %v1700 = vadd.f32 %v1690, %v1698
  %v1701 = vtanh.pop %v1700
  %1703 = vrot.lane.b32.xlu0 %v1701, 64
  %v1704 = vpop.permute.xlu0 %1703
  %v1706 = vmul.f32 %v1688, %v1704
  %1708 = vrot.lane.b32.xlu0 %v1706, 32
  %v1709 = vpop.permute.xlu0 %1708
  %1712 = vrot.lane.b32.xlu0 %v1610, 64
  %v1713 = vpop.permute.xlu0 %1712
  %v1715 = vsel %vm213, %v1709, %v1713
  %v1717 = vsel %vm315, %v1715, 0
  %1719 = vmatprep.subr.mxu0 0.0
  %1720 = vmatpush1.msra.mxu0 %v197
  %1721 = vmatprep.subr.mxu0 0.0
  %1722 = vmatpush1.msra.mxu0 %v198
  %1723 = vmatprep.subr.mxu0 0.0
  %1724 = vmatpush1.msra.mxu0 %v199
  %1725 = vmatprep.subr.mxu0 0.0
  %1726 = vmatpush1.msra.mxu0 %v200
  %1727 = vmatprep.subr.mxu0 0.0
  %1728 = vmatpush1.msra.mxu0 %v201
  %1729 = vmatprep.subr.mxu0 0.0
  %1730 = vmatpush1.msra.mxu0 %v202
  %1731 = vmatprep.subr.mxu0 0.0
  %1732 = vmatpush1.msra.mxu0 %v203
  %1733 = vmatprep.subr.mxu0 0.0
  %1734 = vmatpush1.msra.mxu0 %v204
  %1735 = vmatprep.subr.mxu0 0.0
  %1736 = vmatpush1.msra.mxu0 0.0
  %1737 = vmatprep.subr.mxu0 0.0
  %1738 = vmatpush1.msra.mxu0 0.0
  %1739 = vmatprep.subr.mxu0 0.0
  %1740 = vmatpush1.msra.mxu0 0.0
  %1741 = vmatprep.subr.mxu0 0.0
  %1742 = vmatpush1.msra.mxu0 0.0
  %1743 = vmatprep.subr.mxu0 0.0
  %1744 = vmatpush1.msra.mxu0 0.0
  %1745 = vmatprep.subr.mxu0 0.0
  %1746 = vmatpush1.msra.mxu0 0.0
  %1747 = vmatprep.subr.mxu0 0.0
  %1748 = vmatpush1.msra.mxu0 0.0
  %1749 = vmatprep.subr.mxu0 0.0
  %1750 = vmatpush1.msra.mxu0 0.0
  %1751 = vmatprep.subr.mxu0 0.0
  %1752 = vmatpush1.msra.mxu0 0.0
  %1753 = vmatprep.subr.mxu0 0.0
  %1754 = vmatpush1.msra.mxu0 0.0
  %1755 = vmatprep.subr.mxu0 0.0
  %1756 = vmatpush1.msra.mxu0 0.0
  %1757 = vmatprep.subr.mxu0 0.0
  %1758 = vmatpush1.msra.mxu0 0.0
  %1759 = vmatprep.subr.mxu0 0.0
  %1760 = vmatpush1.msra.mxu0 0.0
  %1761 = vmatprep.subr.mxu0 0.0
  %1762 = vmatpush1.msra.mxu0 0.0
  %1763 = vmatprep.subr.mxu0 0.0
  %1764 = vmatpush1.msra.mxu0 0.0
  %1765 = vmatprep.subr.mxu0 0.0
  %1766 = vmatpush1.msra.mxu0 0.0
  %1767 = vmatprep.subr.mxu0 0.0
  %1768 = vmatpush1.msra.mxu0 0.0
  %1769 = vmatprep.subr.mxu0 0.0
  %1770 = vmatpush1.msra.mxu0 0.0
  %1771 = vmatprep.subr.mxu0 0.0
  %1772 = vmatpush1.msra.mxu0 0.0
  %1773 = vmatprep.subr.mxu0 0.0
  %1774 = vmatpush1.msra.mxu0 0.0
  %1775 = vmatprep.subr.mxu0 0.0
  %1776 = vmatpush1.msra.mxu0 0.0
  %1777 = vmatprep.subr.mxu0 0.0
  %1778 = vmatpush1.msra.mxu0 0.0
  %1779 = vmatprep.subr.mxu0 0.0
  %1780 = vmatpush1.msra.mxu0 0.0
  %1781 = vmatprep.subr.mxu0 0.0
  %1782 = vmatpush1.msra.mxu0 0.0
  %1783 = vmatprep.mubr.f32.mxu0 0.0
  %1784 = vmatmul.mubr.f32.gmra.mrb[0].mxu0 %v1717
  %v1785 = vpop.f32.mrb[0].mxu0
  %v1786 = vadd.f32 %v210, %v1785
  %v1787 = vpop.f32.mrb[0].mxu0
  %1788 = vdwg.mxu0
  %v1789 = vmul.f32 %v1786, 0.5
  %v1790 = vtanh.pop %v1789
  %v1791 = vmul.f32 %v1790, 0.5
  %v1792 = vadd.f32 %v1791, 0.5
  %v1793 = vtanh.pop %v1786
  %v1794 = vmul.f32 %v1792, %v1604
  %1796 = vrot.lane.b32.xlu0 %v1793, 64
  %v1797 = vpop.permute.xlu0 %1796
  %v1799 = vmul.f32 %v1792, %v1797
  %1801 = vrot.lane.b32.xlu0 %v1799, 32
  %v1802 = vpop.permute.xlu0 %1801
  %v1804 = vadd.f32 %v1794, %v1802
  %v1805 = vtanh.pop %v1804
  %1807 = vrot.lane.b32.xlu0 %v1805, 64
  %v1808 = vpop.permute.xlu0 %1807
  %v1810 = vmul.f32 %v1792, %v1808
  %v1811 = vld [vmem:[%s6] sm:$0xff]
  %v1812 = vld [vmem:[%s6 + $0x8] sm:$0xff]
  %v1813 = vld [vmem:[%s6 + $0x10] sm:$0xff]
  %v1814 = vld [vmem:[%s6 + $0x18] sm:$0xff]
  %v1815 = vld [vmem:[%s7] sm:$0x1]
  %v1817 = vlaneseq
  %v1818 = vshrl.u32 %v1817, 7
  %v1819 = vsub.s32 0, %v1818
  %v1820 = vrot.slane %v1815, %v1819
  %1823 = vrot.lane.b32.xlu0 %v1810, 32
  %v1824 = vpop.permute.xlu0 %1823
  %v1825 = vsel %vm213, %v1824, 0
  %1827 = vmatprep.subr.mxu0 0.0
  %1828 = vmatpush1.msra.mxu0 %v1811
  %1829 = vmatprep.subr.mxu0 0.0
  %1830 = vmatpush1.msra.mxu0 %v1812
  %1831 = vmatprep.subr.mxu0 0.0
  %1832 = vmatpush1.msra.mxu0 %v1813
  %1833 = vmatprep.subr.mxu0 0.0
  %1834 = vmatpush1.msra.mxu0 %v1814
  %1835 = vmatprep.subr.mxu0 0.0
  %1836 = vmatpush1.msra.mxu0 0.0
  %1837 = vmatprep.subr.mxu0 0.0
  %1838 = vmatpush1.msra.mxu0 0.0
  %1839 = vmatprep.subr.mxu0 0.0
  %1840 = vmatpush1.msra.mxu0 0.0
  %1841 = vmatprep.subr.mxu0 0.0
  %1842 = vmatpush1.msra.mxu0 0.0
  %1843 = vmatprep.subr.mxu0 0.0
  %1844 = vmatpush1.msra.mxu0 0.0
  %1845 = vmatprep.subr.mxu0 0.0
  %1846 = vmatpush1.msra.mxu0 0.0
  %1847 = vmatprep.subr.mxu0 0.0
  %1848 = vmatpush1.msra.mxu0 0.0
  %1849 = vmatprep.subr.mxu0 0.0
  %1850 = vmatpush1.msra.mxu0 0.0
  %1851 = vmatprep.subr.mxu0 0.0
  %1852 = vmatpush1.msra.mxu0 0.0
  %1853 = vmatprep.subr.mxu0 0.0
  %1854 = vmatpush1.msra.mxu0 0.0
  %1855 = vmatprep.subr.mxu0 0.0
  %1856 = vmatpush1.msra.mxu0 0.0
  %1857 = vmatprep.subr.mxu0 0.0
  %1858 = vmatpush1.msra.mxu0 0.0
  %1859 = vmatprep.subr.mxu0 0.0
  %1860 = vmatpush1.msra.mxu0 0.0
  %1861 = vmatprep.subr.mxu0 0.0
  %1862 = vmatpush1.msra.mxu0 0.0
  %1863 = vmatprep.subr.mxu0 0.0
  %1864 = vmatpush1.msra.mxu0 0.0
  %1865 = vmatprep.subr.mxu0 0.0
  %1866 = vmatpush1.msra.mxu0 0.0
  %1867 = vmatprep.subr.mxu0 0.0
  %1868 = vmatpush1.msra.mxu0 0.0
  %1869 = vmatprep.subr.mxu0 0.0
  %1870 = vmatpush1.msra.mxu0 0.0
  %1871 = vmatprep.subr.mxu0 0.0
  %1872 = vmatpush1.msra.mxu0 0.0
  %1873 = vmatprep.subr.mxu0 0.0
  %1874 = vmatpush1.msra.mxu0 0.0
  %1875 = vmatprep.subr.mxu0 0.0
  %1876 = vmatpush1.msra.mxu0 0.0
  %1877 = vmatprep.subr.mxu0 0.0
  %1878 = vmatpush1.msra.mxu0 0.0
  %1879 = vmatprep.subr.mxu0 0.0
  %1880 = vmatpush1.msra.mxu0 0.0
  %1881 = vmatprep.subr.mxu0 0.0
  %1882 = vmatpush1.msra.mxu0 0.0
  %1883 = vmatprep.subr.mxu0 0.0
  %1884 = vmatpush1.msra.mxu0 0.0
  %1885 = vmatprep.subr.mxu0 0.0
  %1886 = vmatpush1.msra.mxu0 0.0
  %1887 = vmatprep.subr.mxu0 0.0
  %1888 = vmatpush1.msra.mxu0 0.0
  %1889 = vmatprep.subr.mxu0 0.0
  %1890 = vmatpush1.msra.mxu0 0.0
  %1891 = vmatprep.mubr.f32.mxu0 0.0
  %1892 = vmatmul.mubr.f32.gmra.mrb[0].mxu0 %v1825
  %v1893 = vpop.f32.mrb[0].mxu0
  %v1894 = vadd.f32 %v1820, %v1893
  %v1895 = vpop.f32.mrb[0].mxu0
  %1896 = vdwg.mxu0
  %vm1897 = vcmp.gt.f32.partialorder %v1894, 0.0
  %v1898 = vmul.f32 %v1894, 1.442695
  %v1899 = vpow.pop %v1898
  %v1900 = vsub.f32 %v1899, 1.0
  %v1901 = vmul.f32 %v1900, 0.2
  %v1902 = vsel %vm1897, %v1894, %v1901
  %v1903 = vld [vmem:[%s8] sm:$0xff]
  %v1904 = vld [vmem:[%s9] sm:$0x1]
  %v1906 = vlaneseq
  %v1907 = vshrl.u32 %v1906, 7
  %v1908 = vsub.s32 0, %v1907
  %v1909 = vrot.slane %v1904, %v1908
  %vm1911 = vcmask 64512
  %v1913 = vsel %vm1911, %v1902, 0
  %1915 = vmatprep.subr.mxu0 0.0
  %1916 = vmatpush1.msra.mxu0 %v1903
  %1917 = vmatprep.subr.mxu0 0.0
  %1918 = vmatpush1.msra.mxu0 0.0
  %1919 = vmatprep.subr.mxu0 0.0
  %1920 = vmatpush1.msra.mxu0 0.0
  %1921 = vmatprep.subr.mxu0 0.0
  %1922 = vmatpush1.msra.mxu0 0.0
  %1923 = vmatprep.subr.mxu0 0.0
  %1924 = vmatpush1.msra.mxu0 0.0
  %1925 = vmatprep.subr.mxu0 0.0
  %1926 = vmatpush1.msra.mxu0 0.0
  %1927 = vmatprep.subr.mxu0 0.0
  %1928 = vmatpush1.msra.mxu0 0.0
  %1929 = vmatprep.subr.mxu0 0.0
  %1930 = vmatpush1.msra.mxu0 0.0
  %1931 = vmatprep.subr.mxu0 0.0
  %1932 = vmatpush1.msra.mxu0 0.0
  %1933 = vmatprep.subr.mxu0 0.0
  %1934 = vmatpush1.msra.mxu0 0.0
  %1935 = vmatprep.subr.mxu0 0.0
  %1936 = vmatpush1.msra.mxu0 0.0
  %1937 = vmatprep.subr.mxu0 0.0
  %1938 = vmatpush1.msra.mxu0 0.0
  %1939 = vmatprep.subr.mxu0 0.0
  %1940 = vmatpush1.msra.mxu0 0.0
  %1941 = vmatprep.subr.mxu0 0.0
  %1942 = vmatpush1.msra.mxu0 0.0
  %1943 = vmatprep.subr.mxu0 0.0
  %1944 = vmatpush1.msra.mxu0 0.0
  %1945 = vmatprep.subr.mxu0 0.0
  %1946 = vmatpush1.msra.mxu0 0.0
  %1947 = vmatprep.subr.mxu0 0.0
  %1948 = vmatpush1.msra.mxu0 0.0
  %1949 = vmatprep.subr.mxu0 0.0
  %1950 = vmatpush1.msra.mxu0 0.0
  %1951 = vmatprep.subr.mxu0 0.0
  %1952 = vmatpush1.msra.mxu0 0.0
  %1953 = vmatprep.subr.mxu0 0.0
  %1954 = vmatpush1.msra.mxu0 0.0
  %1955 = vmatprep.subr.mxu0 0.0
  %1956 = vmatpush1.msra.mxu0 0.0
  %1957 = vmatprep.subr.mxu0 0.0
  %1958 = vmatpush1.msra.mxu0 0.0
  %1959 = vmatprep.subr.mxu0 0.0
  %1960 = vmatpush1.msra.mxu0 0.0
  %1961 = vmatprep.subr.mxu0 0.0
  %1962 = vmatpush1.msra.mxu0 0.0
  %1963 = vmatprep.subr.mxu0 0.0
  %1964 = vmatpush1.msra.mxu0 0.0
  %1965 = vmatprep.subr.mxu0 0.0
  %1966 = vmatpush1.msra.mxu0 0.0
  %1967 = vmatprep.subr.mxu0 0.0
  %1968 = vmatpush1.msra.mxu0 0.0
  %1969 = vmatprep.subr.mxu0 0.0
  %1970 = vmatpush1.msra.mxu0 0.0
  %1971 = vmatprep.subr.mxu0 0.0
  %1972 = vmatpush1.msra.mxu0 0.0
  %1973 = vmatprep.subr.mxu0 0.0
  %1974 = vmatpush1.msra.mxu0 0.0
  %1975 = vmatprep.subr.mxu0 0.0
  %1976 = vmatpush1.msra.mxu0 0.0
  %1977 = vmatprep.subr.mxu0 0.0
  %1978 = vmatpush1.msra.mxu0 0.0
  %1979 = vmatprep.mubr.f32.mxu0 0.0
  %1980 = vmatmul.mubr.f32.gmra.mrb[0].mxu0 %v1913
  %v1981 = vpop.f32.mrb[0].mxu0
  %v1982 = vadd.f32 %v1909, %v1981
  %v1983 = vpop.f32.mrb[0].mxu0
  %1984 = vdwg.mxu0
  %vm1985 = vcmask 15360
  %1986 = vst.msk [vmem:[%s10] sm:$0xff] %vm1985, %v1982
  // Predicated region
  $region42: #{lstmdis_forward.1} parent=0 // pred_check
    _
  $region43: #{lstmdis_forward.1} parent=0 // pred_check_branch
    %1988 = sbr.rel (0) target = $region45
  $region44: #{lstmdis_forward.1} parent=0 // pred_region
    _
  $region45: #{lstmdis_forward.1} parent=0 // pred_fallthru
    _
  // Predicated region
  $region46: #{lstmdis_forward.1} parent=0 // pred_check
    _
  $region47: #{lstmdis_forward.1} parent=0 // pred_check_branch
    %1990 = sbr.rel (0) target = $region49
  $region48: #{lstmdis_forward.1} parent=0 // pred_region
    _
  $region49: #{lstmdis_forward.1} parent=0 // pred_fallthru
    _

</llo_original>
